<compile_context>
chip_gen: v7x
topology: tpu7x:2x2x1
jax: 0.10.0
libtpu: 0.0.40
codegen_flags: <defaults>
</compile_context>

<pallas_src>
import jax
import jax.numpy as jnp
from jax.experimental import pallas as pl
from jax.experimental.pallas import tpu as pltpu

EMBED_DIM = 128          # PATCH_EMBEDDING_LEN in the PyTorch file
NUM_HEADS = 4
HEAD_DIM = EMBED_DIM // NUM_HEADS
LN_EPS = 1e-5


def attention_kernel(x_ref, lnw_ref, lnb_ref, wqkv_ref, bqkv_ref,
                     wout_ref, bout_ref, o_ref):
    # x_ref: (S, E) tokens of one batch element (leading batch dim squeezed).
    x = x_ref[...].astype(jnp.float32)

    # ---- LayerNorm (matches nn.LayerNorm defaults, eps inside rsqrt) ----
    mean = jnp.mean(x, axis=-1, keepdims=True)
    xc = x - mean
    var = jnp.mean(xc * xc, axis=-1, keepdims=True)
    xn = xc * jax.lax.rsqrt(var + LN_EPS)
    xn = xn * lnw_ref[...] + lnb_ref[...]                       # (S, E)

    # ---- fused (module Linear ∘ MHA in_proj) Q / K / V projections ----
    q = jnp.dot(xn, wqkv_ref[0], preferred_element_type=jnp.float32) + bqkv_ref[0]
    k = jnp.dot(xn, wqkv_ref[1], preferred_element_type=jnp.float32) + bqkv_ref[1]
    v = jnp.dot(xn, wqkv_ref[2], preferred_element_type=jnp.float32) + bqkv_ref[2]

    # ---- multi-head scaled dot-product attention (static unroll over heads) ----
    scale = 1.0 / (HEAD_DIM ** 0.5)
    head_outs = []
    for h in range(NUM_HEADS):
        lo = h * HEAD_DIM
        qh = q[:, lo:lo + HEAD_DIM]                             # (S, d_h)
        kh = k[:, lo:lo + HEAD_DIM]
        vh = v[:, lo:lo + HEAD_DIM]
        # scores = qh @ kh.T  (contract head dim; no materialized transpose)
        s = jax.lax.dot_general(qh, kh, (((1,), (1,)), ((), ())),
                                preferred_element_type=jnp.float32) * scale
        s = s - jnp.max(s, axis=-1, keepdims=True)
        e = jnp.exp(s)
        p = e / jnp.sum(e, axis=-1, keepdims=True)              # (S, S) softmax
        head_outs.append(jnp.dot(p, vh, preferred_element_type=jnp.float32))
    attn = jnp.concatenate(head_outs, axis=-1)                  # (S, E)

    # ---- out_proj ----
    out = jnp.dot(attn, wout_ref[...], preferred_element_type=jnp.float32)
    out = out + bout_ref[...]
    o_ref[...] = out.astype(o_ref.dtype)


def attention_forward(x, ln_w, ln_b, w_qkv, b_qkv, w_in, b_in, w_out, b_out):
    """Fused LayerNorm + Q/K/V Linears + MultiheadAttention forward.

    All weight matrices are pre-transposed (stored so the kernel computes
    activation @ W), matching the reference below.
    """
    B, S, E = x.shape
    assert E == EMBED_DIM

    # Fold the module Linear into the MHA in_proj (batch-independent algebra):
    #   (x W1 + b1) W2 + b2 = x (W1 W2) + (b1 W2 + b2)
    hi = jax.lax.Precision.HIGHEST
    w_fused = jnp.einsum("hij,hjk->hik", w_qkv, w_in, precision=hi)     # (3, E, E)
    b_fused = jnp.einsum("hij,hjk->hik", b_qkv, w_in, precision=hi) + b_in  # (3, 1, E)

    return pl.pallas_call(
        attention_kernel,
        out_shape=jax.ShapeDtypeStruct((B, S, E), x.dtype),
        grid_spec=pl.GridSpec(
            grid=(B,),
            in_specs=[
                pl.BlockSpec((None, S, E), lambda b: (b, 0, 0)),   # x: one batch elem
                pl.BlockSpec((1, E), lambda b: (0, 0)),            # LN gamma
                pl.BlockSpec((1, E), lambda b: (0, 0)),            # LN beta
                pl.BlockSpec((3, E, E), lambda b: (0, 0, 0)),      # fused Wq/Wk/Wv
                pl.BlockSpec((3, 1, E), lambda b: (0, 0, 0)),      # fused bq/bk/bv
                pl.BlockSpec((E, E), lambda b: (0, 0)),            # out_proj W
                pl.BlockSpec((1, E), lambda b: (0, 0)),            # out_proj b
            ],
            out_specs=pl.BlockSpec((None, S, E), lambda b: (b, 0, 0)),
        ),
        compiler_params=pltpu.CompilerParams(
            dimension_semantics=("parallel",),
        ),
    )(x, ln_w, ln_b, w_fused, b_fused, w_out, b_out)


def reference(x, ln_w, ln_b, w_qkv, b_qkv, w_in, b_in, w_out, b_out):
    """Pure-JAX reference of the same forward (LayerNorm -> QKV -> MHA), unfused."""
    B, S, E = x.shape
    mean = jnp.mean(x, axis=-1, keepdims=True)
    xc = x - mean
    var = jnp.mean(xc * xc, axis=-1, keepdims=True)
    xn = xc * jax.lax.rsqrt(var + LN_EPS) * ln_w[0] + ln_b[0]
    q = xn @ w_qkv[0] + b_qkv[0]
    k = xn @ w_qkv[1] + b_qkv[1]
    v = xn @ w_qkv[2] + b_qkv[2]
    q = q @ w_in[0] + b_in[0]
    k = k @ w_in[1] + b_in[1]
    v = v @ w_in[2] + b_in[2]
    qh = q.reshape(B, S, NUM_HEADS, HEAD_DIM)
    kh = k.reshape(B, S, NUM_HEADS, HEAD_DIM)
    vh = v.reshape(B, S, NUM_HEADS, HEAD_DIM)
    s = jnp.einsum("bqhd,bkhd->bhqk", qh, kh) / (HEAD_DIM ** 0.5)
    p = jax.nn.softmax(s, axis=-1)
    o = jnp.einsum("bhqk,bkhd->bqhd", p, vh).reshape(B, S, E)
    return o @ w_out + b_out[0]


if __name__ == "__main__":
    B, S, E = 2, 16, EMBED_DIM
    key = jax.random.PRNGKey(0)
    ks = jax.random.split(key, 9)
    wscale = 1.0 / (E ** 0.5)

    x = jax.random.normal(ks[0], (B, S, E), dtype=jnp.float32)
    ln_w = 1.0 + 0.1 * jax.random.normal(ks[1], (1, E), dtype=jnp.float32)
    ln_b = 0.1 * jax.random.normal(ks[2], (1, E), dtype=jnp.float32)
    w_qkv = jax.random.normal(ks[3], (3, E, E), dtype=jnp.float32) * wscale
    b_qkv = jax.random.normal(ks[4], (3, 1, E), dtype=jnp.float32) * 0.02
    w_in = jax.random.normal(ks[5], (3, E, E), dtype=jnp.float32) * wscale
    b_in = jax.random.normal(ks[6], (3, 1, E), dtype=jnp.float32) * 0.02
    w_out = jax.random.normal(ks[7], (E, E), dtype=jnp.float32) * wscale
    b_out = jax.random.normal(ks[8], (1, E), dtype=jnp.float32) * 0.02

    fwd = jax.jit(attention_forward)
    out = fwd(x, ln_w, ln_b, w_qkv, b_qkv, w_in, b_in, w_out, b_out)
    jax.block_until_ready(out)

    with jax.default_matmul_precision("highest"):
        ref = reference(x, ln_w, ln_b, w_qkv, b_qkv, w_in, b_in, w_out, b_out)
    ref = jax.block_until_ready(ref)

    assert out.shape == (B, S, E)
    err = float(jnp.max(jnp.abs(out - ref)))
    assert jnp.allclose(out, ref, atol=2e-3, rtol=2e-3), f"max abs err {err}"
    print("KERNEL_OK")
</pallas_src>

<mosaic_0001>
module attributes {stable_mosaic.version = 11 : i64} {
  func.func @attention_kernel(%arg0: i32, %arg1: memref<1x16x128xf32, #tpu.memory_space<vmem>>, %arg2: memref<1x128xf32, #tpu.memory_space<vmem>>, %arg3: memref<1x128xf32, #tpu.memory_space<vmem>>, %arg4: memref<3x128x128xf32, #tpu.memory_space<vmem>>, %arg5: memref<3x1x128xf32, #tpu.memory_space<vmem>>, %arg6: memref<128x128xf32, #tpu.memory_space<vmem>>, %arg7: memref<1x128xf32, #tpu.memory_space<vmem>>, %arg8: memref<1x16x128xf32, #tpu.memory_space<vmem>>) attributes {dimension_semantics = [#tpu.dimension_semantics<parallel>], iteration_bounds = array<i64: 2>, scalar_prefetch = 0 : i64, scratch_operands = 0 : i64, tpu.core_type = #tpu.core_type<tc>, window_params = [{transform_indices = @transform_0, window_bounds = array<i64: 1, 16, 128>}, {pipeline_mode = #tpu.pipeline_mode<synchronous>, transform_indices = @transform_1, window_bounds = array<i64: 1, 128>}, {pipeline_mode = #tpu.pipeline_mode<synchronous>, transform_indices = @transform_2, window_bounds = array<i64: 1, 128>}, {pipeline_mode = #tpu.pipeline_mode<synchronous>, transform_indices = @transform_3, window_bounds = array<i64: 3, 128, 128>}, {pipeline_mode = #tpu.pipeline_mode<synchronous>, transform_indices = @transform_4, window_bounds = array<i64: 3, 1, 128>}, {pipeline_mode = #tpu.pipeline_mode<synchronous>, transform_indices = @transform_5, window_bounds = array<i64: 128, 128>}, {pipeline_mode = #tpu.pipeline_mode<synchronous>, transform_indices = @transform_6, window_bounds = array<i64: 1, 128>}, {transform_indices = @transform_7, window_bounds = array<i64: 1, 16, 128>}]} {
    %c0 = arith.constant 0 : index
    %c0_0 = arith.constant 0 : index
    %c0_1 = arith.constant 0 : index
    %0 = vector.load %arg1[%c0, %c0_0, %c0_1] : memref<1x16x128xf32, #tpu.memory_space<vmem>>, vector<1x16x128xf32>
    %1 = vector.shape_cast %0 : vector<1x16x128xf32> to vector<16x128xf32>
    %cst = arith.constant dense<0.000000e+00> : vector<16xf32>
    %2 = vector.multi_reduction <add>, %1, %cst [1] : vector<16x128xf32> to vector<16xf32>
    %3 = vector.shape_cast %2 : vector<16xf32> to vector<16x1xf32>
    %cst_2 = arith.constant 1.280000e+02 : f32
    %4 = vector.broadcast %cst_2 : f32 to vector<16x1xf32>
    %5 = arith.divf %3, %4 : vector<16x1xf32>
    %6 = vector.broadcast %5 : vector<16x1xf32> to vector<16x128xf32>
    %7 = arith.subf %1, %6 : vector<16x128xf32>
    %8 = arith.mulf %7, %7 : vector<16x128xf32>
    %cst_3 = arith.constant dense<0.000000e+00> : vector<16xf32>
    %9 = vector.multi_reduction <add>, %8, %cst_3 [1] : vector<16x128xf32> to vector<16xf32>
    %10 = vector.shape_cast %9 : vector<16xf32> to vector<16x1xf32>
    %cst_4 = arith.constant 1.280000e+02 : f32
    %11 = vector.broadcast %cst_4 : f32 to vector<16x1xf32>
    %12 = arith.divf %10, %11 : vector<16x1xf32>
    %cst_5 = arith.constant 9.99999974E-6 : f32
    %13 = vector.broadcast %cst_5 : f32 to vector<16x1xf32>
    %14 = arith.addf %12, %13 : vector<16x1xf32>
    %15 = math.rsqrt %14 : vector<16x1xf32>
    %16 = vector.broadcast %15 : vector<16x1xf32> to vector<16x128xf32>
    %17 = arith.mulf %7, %16 : vector<16x128xf32>
    %c0_6 = arith.constant 0 : index
    %c0_7 = arith.constant 0 : index
    %18 = vector.load %arg2[%c0_6, %c0_7] : memref<1x128xf32, #tpu.memory_space<vmem>>, vector<1x128xf32>
    %19 = vector.broadcast %18 : vector<1x128xf32> to vector<16x128xf32>
    %20 = arith.mulf %17, %19 : vector<16x128xf32>
    %c0_8 = arith.constant 0 : index
    %c0_9 = arith.constant 0 : index
    %21 = vector.load %arg3[%c0_8, %c0_9] : memref<1x128xf32, #tpu.memory_space<vmem>>, vector<1x128xf32>
    %22 = vector.broadcast %21 : vector<1x128xf32> to vector<16x128xf32>
    %23 = arith.addf %20, %22 : vector<16x128xf32>
    %c0_10 = arith.constant 0 : index
    %c0_11 = arith.constant 0 : index
    %c0_12 = arith.constant 0 : index
    %24 = vector.load %arg4[%c0_10, %c0_11, %c0_12] : memref<3x128x128xf32, #tpu.memory_space<vmem>>, vector<1x128x128xf32>
    %25 = vector.shape_cast %24 : vector<1x128x128xf32> to vector<128x128xf32>
    %cst_13 = arith.constant dense<0.000000e+00> : vector<16x128xf32>
    %26 = tpu.matmul %23, %25, %cst_13 {dimension_numbers = #tpu.dot_dimension_numbers<[1], [0], [0], [1], [0, 0, 1, 1], [], []>} : vector<16x128xf32>, vector<128x128xf32>, vector<16x128xf32> -> vector<16x128xf32>
    %c0_14 = arith.constant 0 : index
    %c0_15 = arith.constant 0 : index
    %c0_16 = arith.constant 0 : index
    %27 = vector.load %arg5[%c0_14, %c0_15, %c0_16] : memref<3x1x128xf32, #tpu.memory_space<vmem>>, vector<1x1x128xf32>
    %28 = vector.shape_cast %27 : vector<1x1x128xf32> to vector<1x128xf32>
    %29 = vector.broadcast %28 : vector<1x128xf32> to vector<16x128xf32>
    %30 = arith.addf %26, %29 : vector<16x128xf32>
    %c1 = arith.constant 1 : index
    %c0_17 = arith.constant 0 : index
    %c0_18 = arith.constant 0 : index
    %31 = vector.load %arg4[%c1, %c0_17, %c0_18] : memref<3x128x128xf32, #tpu.memory_space<vmem>>, vector<1x128x128xf32>
    %32 = vector.shape_cast %31 : vector<1x128x128xf32> to vector<128x128xf32>
    %cst_19 = arith.constant dense<0.000000e+00> : vector<16x128xf32>
    %33 = tpu.matmul %23, %32, %cst_19 {dimension_numbers = #tpu.dot_dimension_numbers<[1], [0], [0], [1], [0, 0, 1, 1], [], []>} : vector<16x128xf32>, vector<128x128xf32>, vector<16x128xf32> -> vector<16x128xf32>
    %c1_20 = arith.constant 1 : index
    %c0_21 = arith.constant 0 : index
    %c0_22 = arith.constant 0 : index
    %34 = vector.load %arg5[%c1_20, %c0_21, %c0_22] : memref<3x1x128xf32, #tpu.memory_space<vmem>>, vector<1x1x128xf32>
    %35 = vector.shape_cast %34 : vector<1x1x128xf32> to vector<1x128xf32>
    %36 = vector.broadcast %35 : vector<1x128xf32> to vector<16x128xf32>
    %37 = arith.addf %33, %36 : vector<16x128xf32>
    %c2 = arith.constant 2 : index
    %c0_23 = arith.constant 0 : index
    %c0_24 = arith.constant 0 : index
    %38 = vector.load %arg4[%c2, %c0_23, %c0_24] : memref<3x128x128xf32, #tpu.memory_space<vmem>>, vector<1x128x128xf32>
    %39 = vector.shape_cast %38 : vector<1x128x128xf32> to vector<128x128xf32>
    %cst_25 = arith.constant dense<0.000000e+00> : vector<16x128xf32>
    %40 = tpu.matmul %23, %39, %cst_25 {dimension_numbers = #tpu.dot_dimension_numbers<[1], [0], [0], [1], [0, 0, 1, 1], [], []>} : vector<16x128xf32>, vector<128x128xf32>, vector<16x128xf32> -> vector<16x128xf32>
    %c2_26 = arith.constant 2 : index
    %c0_27 = arith.constant 0 : index
    %c0_28 = arith.constant 0 : index
    %41 = vector.load %arg5[%c2_26, %c0_27, %c0_28] : memref<3x1x128xf32, #tpu.memory_space<vmem>>, vector<1x1x128xf32>
    %42 = vector.shape_cast %41 : vector<1x1x128xf32> to vector<1x128xf32>
    %43 = vector.broadcast %42 : vector<1x128xf32> to vector<16x128xf32>
    %44 = arith.addf %40, %43 : vector<16x128xf32>
    %45 = vector.extract_strided_slice %30 {offsets = [0, 0], sizes = [16, 32], strides = [1, 1]} : vector<16x128xf32> to vector<16x32xf32>
    %46 = vector.extract_strided_slice %37 {offsets = [0, 0], sizes = [16, 32], strides = [1, 1]} : vector<16x128xf32> to vector<16x32xf32>
    %47 = vector.extract_strided_slice %44 {offsets = [0, 0], sizes = [16, 32], strides = [1, 1]} : vector<16x128xf32> to vector<16x32xf32>
    %cst_29 = arith.constant dense<0.000000e+00> : vector<16x16xf32>
    %48 = tpu.matmul %45, %46, %cst_29 {dimension_numbers = #tpu.dot_dimension_numbers<[1], [1], [0], [0], [0, 0, 1, 0], [], []>} : vector<16x32xf32>, vector<16x32xf32>, vector<16x16xf32> -> vector<16x16xf32>
    %cst_30 = arith.constant 0.176776692 : f32
    %49 = vector.broadcast %cst_30 : f32 to vector<16x16xf32>
    %50 = arith.mulf %48, %49 : vector<16x16xf32>
    %cst_31 = arith.constant dense<0xFF800000> : vector<16xf32>
    %51 = vector.multi_reduction <maximumf>, %50, %cst_31 [1] : vector<16x16xf32> to vector<16xf32>
    %52 = vector.shape_cast %51 : vector<16xf32> to vector<16x1xf32>
    %53 = vector.broadcast %52 : vector<16x1xf32> to vector<16x16xf32>
    %54 = arith.subf %50, %53 : vector<16x16xf32>
    %55 = math.exp %54 : vector<16x16xf32>
    %cst_32 = arith.constant dense<0.000000e+00> : vector<16xf32>
    %56 = vector.multi_reduction <add>, %55, %cst_32 [1] : vector<16x16xf32> to vector<16xf32>
    %57 = vector.shape_cast %56 : vector<16xf32> to vector<16x1xf32>
    %58 = vector.broadcast %57 : vector<16x1xf32> to vector<16x16xf32>
    %59 = arith.divf %55, %58 : vector<16x16xf32>
    %cst_33 = arith.constant dense<0.000000e+00> : vector<16x32xf32>
    %60 = tpu.matmul %59, %47, %cst_33 {dimension_numbers = #tpu.dot_dimension_numbers<[1], [0], [0], [1], [0, 0, 1, 1], [], []>} : vector<16x16xf32>, vector<16x32xf32>, vector<16x32xf32> -> vector<16x32xf32>
    %61 = vector.extract_strided_slice %30 {offsets = [0, 32], sizes = [16, 32], strides = [1, 1]} : vector<16x128xf32> to vector<16x32xf32>
    %62 = vector.extract_strided_slice %37 {offsets = [0, 32], sizes = [16, 32], strides = [1, 1]} : vector<16x128xf32> to vector<16x32xf32>
    %63 = vector.extract_strided_slice %44 {offsets = [0, 32], sizes = [16, 32], strides = [1, 1]} : vector<16x128xf32> to vector<16x32xf32>
    %cst_34 = arith.constant dense<0.000000e+00> : vector<16x16xf32>
    %64 = tpu.matmul %61, %62, %cst_34 {dimension_numbers = #tpu.dot_dimension_numbers<[1], [1], [0], [0], [0, 0, 1, 0], [], []>} : vector<16x32xf32>, vector<16x32xf32>, vector<16x16xf32> -> vector<16x16xf32>
    %cst_35 = arith.constant 0.176776692 : f32
    %65 = vector.broadcast %cst_35 : f32 to vector<16x16xf32>
    %66 = arith.mulf %64, %65 : vector<16x16xf32>
    %cst_36 = arith.constant dense<0xFF800000> : vector<16xf32>
    %67 = vector.multi_reduction <maximumf>, %66, %cst_36 [1] : vector<16x16xf32> to vector<16xf32>
    %68 = vector.shape_cast %67 : vector<16xf32> to vector<16x1xf32>
    %69 = vector.broadcast %68 : vector<16x1xf32> to vector<16x16xf32>
    %70 = arith.subf %66, %69 : vector<16x16xf32>
    %71 = math.exp %70 : vector<16x16xf32>
    %cst_37 = arith.constant dense<0.000000e+00> : vector<16xf32>
    %72 = vector.multi_reduction <add>, %71, %cst_37 [1] : vector<16x16xf32> to vector<16xf32>
    %73 = vector.shape_cast %72 : vector<16xf32> to vector<16x1xf32>
    %74 = vector.broadcast %73 : vector<16x1xf32> to vector<16x16xf32>
    %75 = arith.divf %71, %74 : vector<16x16xf32>
    %cst_38 = arith.constant dense<0.000000e+00> : vector<16x32xf32>
    %76 = tpu.matmul %75, %63, %cst_38 {dimension_numbers = #tpu.dot_dimension_numbers<[1], [0], [0], [1], [0, 0, 1, 1], [], []>} : vector<16x16xf32>, vector<16x32xf32>, vector<16x32xf32> -> vector<16x32xf32>
    %77 = vector.extract_strided_slice %30 {offsets = [0, 64], sizes = [16, 32], strides = [1, 1]} : vector<16x128xf32> to vector<16x32xf32>
    %78 = vector.extract_strided_slice %37 {offsets = [0, 64], sizes = [16, 32], strides = [1, 1]} : vector<16x128xf32> to vector<16x32xf32>
    %79 = vector.extract_strided_slice %44 {offsets = [0, 64], sizes = [16, 32], strides = [1, 1]} : vector<16x128xf32> to vector<16x32xf32>
    %cst_39 = arith.constant dense<0.000000e+00> : vector<16x16xf32>
    %80 = tpu.matmul %77, %78, %cst_39 {dimension_numbers = #tpu.dot_dimension_numbers<[1], [1], [0], [0], [0, 0, 1, 0], [], []>} : vector<16x32xf32>, vector<16x32xf32>, vector<16x16xf32> -> vector<16x16xf32>
    %cst_40 = arith.constant 0.176776692 : f32
    %81 = vector.broadcast %cst_40 : f32 to vector<16x16xf32>
    %82 = arith.mulf %80, %81 : vector<16x16xf32>
    %cst_41 = arith.constant dense<0xFF800000> : vector<16xf32>
    %83 = vector.multi_reduction <maximumf>, %82, %cst_41 [1] : vector<16x16xf32> to vector<16xf32>
    %84 = vector.shape_cast %83 : vector<16xf32> to vector<16x1xf32>
    %85 = vector.broadcast %84 : vector<16x1xf32> to vector<16x16xf32>
    %86 = arith.subf %82, %85 : vector<16x16xf32>
    %87 = math.exp %86 : vector<16x16xf32>
    %cst_42 = arith.constant dense<0.000000e+00> : vector<16xf32>
    %88 = vector.multi_reduction <add>, %87, %cst_42 [1] : vector<16x16xf32> to vector<16xf32>
    %89 = vector.shape_cast %88 : vector<16xf32> to vector<16x1xf32>
    %90 = vector.broadcast %89 : vector<16x1xf32> to vector<16x16xf32>
    %91 = arith.divf %87, %90 : vector<16x16xf32>
    %cst_43 = arith.constant dense<0.000000e+00> : vector<16x32xf32>
    %92 = tpu.matmul %91, %79, %cst_43 {dimension_numbers = #tpu.dot_dimension_numbers<[1], [0], [0], [1], [0, 0, 1, 1], [], []>} : vector<16x16xf32>, vector<16x32xf32>, vector<16x32xf32> -> vector<16x32xf32>
    %93 = vector.extract_strided_slice %30 {offsets = [0, 96], sizes = [16, 32], strides = [1, 1]} : vector<16x128xf32> to vector<16x32xf32>
    %94 = vector.extract_strided_slice %37 {offsets = [0, 96], sizes = [16, 32], strides = [1, 1]} : vector<16x128xf32> to vector<16x32xf32>
    %95 = vector.extract_strided_slice %44 {offsets = [0, 96], sizes = [16, 32], strides = [1, 1]} : vector<16x128xf32> to vector<16x32xf32>
    %cst_44 = arith.constant dense<0.000000e+00> : vector<16x16xf32>
    %96 = tpu.matmul %93, %94, %cst_44 {dimension_numbers = #tpu.dot_dimension_numbers<[1], [1], [0], [0], [0, 0, 1, 0], [], []>} : vector<16x32xf32>, vector<16x32xf32>, vector<16x16xf32> -> vector<16x16xf32>
    %cst_45 = arith.constant 0.176776692 : f32
    %97 = vector.broadcast %cst_45 : f32 to vector<16x16xf32>
    %98 = arith.mulf %96, %97 : vector<16x16xf32>
    %cst_46 = arith.constant dense<0xFF800000> : vector<16xf32>
    %99 = vector.multi_reduction <maximumf>, %98, %cst_46 [1] : vector<16x16xf32> to vector<16xf32>
    %100 = vector.shape_cast %99 : vector<16xf32> to vector<16x1xf32>
    %101 = vector.broadcast %100 : vector<16x1xf32> to vector<16x16xf32>
    %102 = arith.subf %98, %101 : vector<16x16xf32>
    %103 = math.exp %102 : vector<16x16xf32>
    %cst_47 = arith.constant dense<0.000000e+00> : vector<16xf32>
    %104 = vector.multi_reduction <add>, %103, %cst_47 [1] : vector<16x16xf32> to vector<16xf32>
    %105 = vector.shape_cast %104 : vector<16xf32> to vector<16x1xf32>
    %106 = vector.broadcast %105 : vector<16x1xf32> to vector<16x16xf32>
    %107 = arith.divf %103, %106 : vector<16x16xf32>
    %cst_48 = arith.constant dense<0.000000e+00> : vector<16x32xf32>
    %108 = tpu.matmul %107, %95, %cst_48 {dimension_numbers = #tpu.dot_dimension_numbers<[1], [0], [0], [1], [0, 0, 1, 1], [], []>} : vector<16x16xf32>, vector<16x32xf32>, vector<16x32xf32> -> vector<16x32xf32>
    %109 = tpu.concatenate %60, %76, %92, %108 in 1 : vector<16x32xf32>, vector<16x32xf32>, vector<16x32xf32>, vector<16x32xf32> -> vector<16x128xf32>
    %c0_49 = arith.constant 0 : index
    %c0_50 = arith.constant 0 : index
    %110 = vector.load %arg6[%c0_49, %c0_50] : memref<128x128xf32, #tpu.memory_space<vmem>>, vector<128x128xf32>
    %cst_51 = arith.constant dense<0.000000e+00> : vector<16x128xf32>
    %111 = tpu.matmul %109, %110, %cst_51 {dimension_numbers = #tpu.dot_dimension_numbers<[1], [0], [0], [1], [0, 0, 1, 1], [], []>} : vector<16x128xf32>, vector<128x128xf32>, vector<16x128xf32> -> vector<16x128xf32>
    %c0_52 = arith.constant 0 : index
    %c0_53 = arith.constant 0 : index
    %112 = vector.load %arg7[%c0_52, %c0_53] : memref<1x128xf32, #tpu.memory_space<vmem>>, vector<1x128xf32>
    %113 = vector.broadcast %112 : vector<1x128xf32> to vector<16x128xf32>
    %114 = arith.addf %111, %113 : vector<16x128xf32>
    %c0_54 = arith.constant 0 : index
    %c0_55 = arith.constant 0 : index
    %c0_56 = arith.constant 0 : index
    %115 = vector.load %arg8[%c0_54, %c0_55, %c0_56] : memref<1x16x128xf32, #tpu.memory_space<vmem>>, vector<1x16x128xf32>
    %116 = vector.shape_cast %115 : vector<1x16x128xf32> to vector<16x128xf32>
    %117 = vector.shape_cast %114 : vector<16x128xf32> to vector<1x16x128xf32>
    tpu.vector_store %arg8[%c0_54, %c0_55, %c0_56], %117 {strides = array<i32>} : memref<1x16x128xf32, #tpu.memory_space<vmem>>, vector<1x16x128xf32>,
    return
  }
  func.func @transform_0(%arg0: i32) -> (i32, i32, i32) {
    %c0_i32 = arith.constant 0 : i32
    %c0_i32_0 = arith.constant 0 : i32
    %c0_i32_1 = arith.constant 0 : i32
    return %arg0, %c0_i32, %c0_i32_0 : i32, i32, i32
  }
  func.func @transform_1(%arg0: i32) -> (i32, i32) {
    %c0_i32 = arith.constant 0 : i32
    %c0_i32_0 = arith.constant 0 : i32
    %c0_i32_1 = arith.constant 0 : i32
    return %c0_i32, %c0_i32_0 : i32, i32
  }
  func.func @transform_2(%arg0: i32) -> (i32, i32) {
    %c0_i32 = arith.constant 0 : i32
    %c0_i32_0 = arith.constant 0 : i32
    %c0_i32_1 = arith.constant 0 : i32
    return %c0_i32, %c0_i32_0 : i32, i32
  }
  func.func @transform_3(%arg0: i32) -> (i32, i32, i32) {
    %c0_i32 = arith.constant 0 : i32
    %c0_i32_0 = arith.constant 0 : i32
    %c0_i32_1 = arith.constant 0 : i32
    %c0_i32_2 = arith.constant 0 : i32
    return %c0_i32, %c0_i32_0, %c0_i32_1 : i32, i32, i32
  }
  func.func @transform_4(%arg0: i32) -> (i32, i32, i32) {
    %c0_i32 = arith.constant 0 : i32
    %c0_i32_0 = arith.constant 0 : i32
    %c0_i32_1 = arith.constant 0 : i32
    %c0_i32_2 = arith.constant 0 : i32
    return %c0_i32, %c0_i32_0, %c0_i32_1 : i32, i32, i32
  }
  func.func @transform_5(%arg0: i32) -> (i32, i32) {
    %c0_i32 = arith.constant 0 : i32
    %c0_i32_0 = arith.constant 0 : i32
    %c0_i32_1 = arith.constant 0 : i32
    return %c0_i32, %c0_i32_0 : i32, i32
  }
  func.func @transform_6(%arg0: i32) -> (i32, i32) {
    %c0_i32 = arith.constant 0 : i32
    %c0_i32_0 = arith.constant 0 : i32
    %c0_i32_1 = arith.constant 0 : i32
    return %c0_i32, %c0_i32_0 : i32, i32
  }
  func.func @transform_7(%arg0: i32) -> (i32, i32, i32) {
    %c0_i32 = arith.constant 0 : i32
    %c0_i32_0 = arith.constant 0 : i32
    %c0_i32_1 = arith.constant 0 : i32
    return %arg0, %c0_i32, %c0_i32_0 : i32, i32, i32
  }
}

</mosaic_0001>

<llo_original>
// kernel: attention_forward.1
$region0: #{attention_forward.1}
  #allocation0 [shape = 'u32[]', space=smem, size = 0x4, offset = 0x4, fixed_abs, tag = 'smem constant byte address 0x4 - core index']
  #allocation1 [shape = 'u32[144,128]{1,0:T(1,128)}', space=vmem, size = 0x12000, scoped, tag = 'internal scratch']
  %s0 = inlined_call_operand.vmem [shape: f32[2,16,128], index: 0, kind: input, shape index: {}]
  %s1 = inlined_call_operand.vmem [shape: f32[1,128], index: 1, kind: input, shape index: {}]
  %s2 = inlined_call_operand.vmem [shape: f32[1,128], index: 2, kind: input, shape index: {}]
  %s3 = inlined_call_operand.vmem [shape: f32[3,128,128], index: 3, kind: input, shape index: {}]
  %s4 = inlined_call_operand.vmem [shape: f32[3,1,128], index: 4, kind: input, shape index: {}]
  %s5 = inlined_call_operand.vmem [shape: f32[128,128], index: 5, kind: input, shape index: {}]
  %s6 = inlined_call_operand.vmem [shape: f32[1,128], index: 6, kind: input, shape index: {}]
  %s7 = inlined_call_operand.hbm [shape: f32[2,16,128], index: 7, kind: output, shape index: {}]
  %s8 = sld [smem:[#allocation0]]
  $region61: #{attention_forward.1} parent=0
    _
  %s10 = ssub.s32 1, %s8
  %s11 = scalar_select 0, %s10, %s8
  $region1: #{attention_forward.1} parent=0
    #allocation2 [shape = 'u8[16384]{0}', space=vmem, size = 0x4000, scoped, tag = 'output window, operand 0']
    #allocation3 [shape = 's32[2]{0}', space=sflag, size = 0x8, scoped, tag = 'scoped memory for attention_forward.1']
    %12 = vsyncpa [#allocation3], 0
    %s13 = scalar_lea.sflag [#allocation3], 1
    %14 = vsyncpa %s13, 0
    loop: start=0, step=1, limit=4
    $region2: #{attention_forward.1} parent=1 // loop_pre_header
      _
    $region3: #{attention_forward.1} parent=1 // loop_header
      %s16 = sphi 0, %s20
      %p17 = scmp.ge.s32.totalorder %s16, 4
      %s26 = sphi 0, %s28
      %s29 = sphi 0, %s26
      %s30 = sphi 0, %s29
      %s46 = sphi 0, %s30
      %s50 = sphi 0, %s50
      %s52 = sphi 0, %s50
      %s53 = sphi 0, %s52
      %s67 = sphi 0, %s53
      %s71 = sphi 0, %s71
      %s73 = sphi 0, %s71
      %s74 = sphi 0, %s73
      %s88 = sphi 0, %s74
      %s92 = sphi 0, %s92
      %s94 = sphi 0, %s92
      %s95 = sphi 0, %s94
      %s109 = sphi 0, %s95
      %s113 = sphi 0, %s113
      %s115 = sphi 0, %s113
      %s116 = sphi 0, %s115
      %s130 = sphi 0, %s116
      %s134 = sphi 0, %s134
      %s136 = sphi 0, %s134
      %s137 = sphi 0, %s136
      %s151 = sphi 0, %s137
      %s155 = sphi 0, %s155
      %s157 = sphi 0, %s155
      %s158 = sphi 0, %s157
      %s172 = sphi 0, %s158
      %s178 = sphi 0, %s180
      %s181 = sphi 0, %s178
      %s182 = sphi 0, %s181
      %s198 = sphi 0, %s182
    $region4: #{attention_forward.1} parent=1 // loop_header_branch
      %19 = sbr.rel (%p17) target = $region8
    $region5: #{attention_forward.1} parent=1 // loop_body
      %s21 = ssub.s32 %s16, 1
      %s22 = ssub.s32 %s16, 2
      %s23 = sadd.s32 %s16, 1
      %s24 = ssub.s32 %s16, %s23
      %p25 = scmp.eq.s32.totalorder %s24, 0
      %s27 = sadd.s32 %s26, 1
      %s28 = scalar_select %p25, %s26, %s27
      %p31 = pneg %p25
      %p32 = scmp.eq.s32.totalorder %s16, 1
      %p33 = por %p31, %p32
      %p34 = scmp.ne.s32.totalorder %s26, %s29
      %p35 = scmp.eq.s32.totalorder %s16, 0
      %p36 = por %p34, %p35
      %p37 = scmp.ne.s32.totalorder %s26, %s29
      %p38 = scmp.eq.s32.totalorder %s21, 1
      %p39 = por %p37, %p38
      %p40 = scmp.ne.s32.totalorder %s29, %s30
      %p41 = scmp.eq.s32.totalorder %s21, 0
      %p42 = por %p40, %p41
      %p43 = scmp.ne.s32.totalorder %s29, %s30
      %p44 = scmp.eq.s32.totalorder %s22, 1
      %p45 = por %p43, %p44
      %p47 = scmp.ne.s32.totalorder %s30, %s46
      %p48 = scmp.eq.s32.totalorder %s22, 0
      %p49 = por %p47, %p48
      %s51 = sadd.s32 %s50, 1
      %p54 = scmp.eq.s32.totalorder %s16, 1
      %p55 = scmp.ne.s32.totalorder %s50, %s52
      %p56 = scmp.eq.s32.totalorder %s16, 0
      %p57 = por %p55, %p56
      %p58 = scmp.ne.s32.totalorder %s50, %s52
      %p59 = scmp.eq.s32.totalorder %s21, 1
      %p60 = por %p58, %p59
      %p61 = scmp.ne.s32.totalorder %s52, %s53
      %p62 = scmp.eq.s32.totalorder %s21, 0
      %p63 = por %p61, %p62
      %p64 = scmp.ne.s32.totalorder %s52, %s53
      %p65 = scmp.eq.s32.totalorder %s22, 1
      %p66 = por %p64, %p65
      %p68 = scmp.ne.s32.totalorder %s53, %s67
      %p69 = scmp.eq.s32.totalorder %s22, 0
      %p70 = por %p68, %p69
      %s72 = sadd.s32 %s71, 1
      %p75 = scmp.eq.s32.totalorder %s16, 1
      %p76 = scmp.ne.s32.totalorder %s71, %s73
      %p77 = scmp.eq.s32.totalorder %s16, 0
      %p78 = por %p76, %p77
      %p79 = scmp.ne.s32.totalorder %s71, %s73
      %p80 = scmp.eq.s32.totalorder %s21, 1
      %p81 = por %p79, %p80
      %p82 = scmp.ne.s32.totalorder %s73, %s74
      %p83 = scmp.eq.s32.totalorder %s21, 0
      %p84 = por %p82, %p83
      %p85 = scmp.ne.s32.totalorder %s73, %s74
      %p86 = scmp.eq.s32.totalorder %s22, 1
      %p87 = por %p85, %p86
      %p89 = scmp.ne.s32.totalorder %s74, %s88
      %p90 = scmp.eq.s32.totalorder %s22, 0
      %p91 = por %p89, %p90
      %s93 = sadd.s32 %s92, 1
      %p96 = scmp.eq.s32.totalorder %s16, 1
      %p97 = scmp.ne.s32.totalorder %s92, %s94
      %p98 = scmp.eq.s32.totalorder %s16, 0
      %p99 = por %p97, %p98
      %p100 = scmp.ne.s32.totalorder %s92, %s94
      %p101 = scmp.eq.s32.totalorder %s21, 1
      %p102 = por %p100, %p101
      %p103 = scmp.ne.s32.totalorder %s94, %s95
      %p104 = scmp.eq.s32.totalorder %s21, 0
      %p105 = por %p103, %p104
      %p106 = scmp.ne.s32.totalorder %s94, %s95
      %p107 = scmp.eq.s32.totalorder %s22, 1
      %p108 = por %p106, %p107
      %p110 = scmp.ne.s32.totalorder %s95, %s109
      %p111 = scmp.eq.s32.totalorder %s22, 0
      %p112 = por %p110, %p111
      %s114 = sadd.s32 %s113, 1
      %p117 = scmp.eq.s32.totalorder %s16, 1
      %p118 = scmp.ne.s32.totalorder %s113, %s115
      %p119 = scmp.eq.s32.totalorder %s16, 0
      %p120 = por %p118, %p119
      %p121 = scmp.ne.s32.totalorder %s113, %s115
      %p122 = scmp.eq.s32.totalorder %s21, 1
      %p123 = por %p121, %p122
      %p124 = scmp.ne.s32.totalorder %s115, %s116
      %p125 = scmp.eq.s32.totalorder %s21, 0
      %p126 = por %p124, %p125
      %p127 = scmp.ne.s32.totalorder %s115, %s116
      %p128 = scmp.eq.s32.totalorder %s22, 1
      %p129 = por %p127, %p128
      %p131 = scmp.ne.s32.totalorder %s116, %s130
      %p132 = scmp.eq.s32.totalorder %s22, 0
      %p133 = por %p131, %p132
      %s135 = sadd.s32 %s134, 1
      %p138 = scmp.eq.s32.totalorder %s16, 1
      %p139 = scmp.ne.s32.totalorder %s134, %s136
      %p140 = scmp.eq.s32.totalorder %s16, 0
      %p141 = por %p139, %p140
      %p142 = scmp.ne.s32.totalorder %s134, %s136
      %p143 = scmp.eq.s32.totalorder %s21, 1
      %p144 = por %p142, %p143
      %p145 = scmp.ne.s32.totalorder %s136, %s137
      %p146 = scmp.eq.s32.totalorder %s21, 0
      %p147 = por %p145, %p146
      %p148 = scmp.ne.s32.totalorder %s136, %s137
      %p149 = scmp.eq.s32.totalorder %s22, 1
      %p150 = por %p148, %p149
      %p152 = scmp.ne.s32.totalorder %s137, %s151
      %p153 = scmp.eq.s32.totalorder %s22, 0
      %p154 = por %p152, %p153
      %s156 = sadd.s32 %s155, 1
      %p159 = scmp.eq.s32.totalorder %s16, 1
      %p160 = scmp.ne.s32.totalorder %s155, %s157
      %p161 = scmp.eq.s32.totalorder %s16, 0
      %p162 = por %p160, %p161
      %p163 = scmp.ne.s32.totalorder %s155, %s157
      %p164 = scmp.eq.s32.totalorder %s21, 1
      %p165 = por %p163, %p164
      %p166 = scmp.ne.s32.totalorder %s157, %s158
      %p167 = scmp.eq.s32.totalorder %s21, 0
      %p168 = por %p166, %p167
      %p169 = scmp.ne.s32.totalorder %s157, %s158
      %p170 = scmp.eq.s32.totalorder %s22, 1
      %p171 = por %p169, %p170
      %p173 = scmp.ne.s32.totalorder %s158, %s172
      %p174 = scmp.eq.s32.totalorder %s22, 0
      %p175 = por %p173, %p174
      %s176 = ssub.s32 %s16, %s23
      %p177 = scmp.eq.s32.totalorder %s176, 0
      %s179 = sadd.s32 %s178, 1
      %s180 = scalar_select %p177, %s178, %s179
      %p183 = pneg %p177
      %p184 = scmp.eq.s32.totalorder %s16, 1
      %p185 = por %p183, %p184
      %p186 = scmp.ne.s32.totalorder %s178, %s181
      %p187 = scmp.eq.s32.totalorder %s16, 0
      %p188 = por %p186, %p187
      %p189 = scmp.ne.s32.totalorder %s178, %s181
      %p190 = scmp.eq.s32.totalorder %s21, 1
      %p191 = por %p189, %p190
      %p192 = scmp.ne.s32.totalorder %s181, %s182
      %p193 = scmp.eq.s32.totalorder %s21, 0
      %p194 = por %p192, %p193
      %p195 = scmp.ne.s32.totalorder %s181, %s182
      %p196 = scmp.eq.s32.totalorder %s22, 1
      %p197 = por %p195, %p196
      %p199 = scmp.ne.s32.totalorder %s182, %s198
      %p200 = scmp.eq.s32.totalorder %s22, 0
      %p201 = por %p199, %p200
      %p202 = scmp.le.s32.totalorder 1, %s16
      %p203 = scmp.lt.s32.totalorder %s16, 3
      %p204 = pnand %p202, %p203
      %p205 = pneg %p204
      // Predicated region
      $region9: #{attention_forward.1} parent=5 // pred_check
        _
      $region10: #{attention_forward.1} parent=5 // pred_check_branch
        %207 = sbr.rel (%p204) target = $region12
      $region11: #{attention_forward.1} parent=5 // pred_region
        %s208 = ssub.s32 %s16, 1
        // Predicated region
        $region13: #{attention_forward.1} parent=11 // pred_check
          %p209 = pneg %p63
        $region14: #{attention_forward.1} parent=11 // pred_check_branch
          %211 = sbr.rel (%p209) target = $region16
        $region15: #{attention_forward.1} parent=11 // pred_region
          _
        $region16: #{attention_forward.1} parent=11 // pred_fallthru
          _
        // Predicated region
        $region17: #{attention_forward.1} parent=11 // pred_check
          %p212 = pneg %p84
        $region18: #{attention_forward.1} parent=11 // pred_check_branch
          %214 = sbr.rel (%p212) target = $region20
        $region19: #{attention_forward.1} parent=11 // pred_region
          _
        $region20: #{attention_forward.1} parent=11 // pred_fallthru
          _
        // Predicated region
        $region21: #{attention_forward.1} parent=11 // pred_check
          %p215 = pneg %p105
        $region22: #{attention_forward.1} parent=11 // pred_check_branch
          %217 = sbr.rel (%p215) target = $region24
        $region23: #{attention_forward.1} parent=11 // pred_region
          _
        $region24: #{attention_forward.1} parent=11 // pred_fallthru
          _
        // Predicated region
        $region25: #{attention_forward.1} parent=11 // pred_check
          %p218 = pneg %p126
        $region26: #{attention_forward.1} parent=11 // pred_check_branch
          %220 = sbr.rel (%p218) target = $region28
        $region27: #{attention_forward.1} parent=11 // pred_region
          _
        $region28: #{attention_forward.1} parent=11 // pred_fallthru
          _
        // Predicated region
        $region29: #{attention_forward.1} parent=11 // pred_check
          %p221 = pneg %p147
        $region30: #{attention_forward.1} parent=11 // pred_check_branch
          %223 = sbr.rel (%p221) target = $region32
        $region31: #{attention_forward.1} parent=11 // pred_region
          _
        $region32: #{attention_forward.1} parent=11 // pred_fallthru
          _
        // Predicated region
        $region33: #{attention_forward.1} parent=11 // pred_check
          %p224 = pneg %p168
        $region34: #{attention_forward.1} parent=11 // pred_check_branch
          %226 = sbr.rel (%p224) target = $region36
        $region35: #{attention_forward.1} parent=11 // pred_region
          _
        $region36: #{attention_forward.1} parent=11 // pred_fallthru
          _
      $region12: #{attention_forward.1} parent=5 // pred_fallthru
        _
      %p227 = scmp.lt.s32.totalorder %s16, 2
      // Predicated region
      $region37: #{attention_forward.1} parent=5 // pred_check
        %p228 = pneg %p227
      $region38: #{attention_forward.1} parent=5 // pred_check_branch
        %230 = sbr.rel (%p228) target = $region40
      $region39: #{attention_forward.1} parent=5 // pred_region
        // Predicated region
        $region41: #{attention_forward.1} parent=39 // pred_check
          %p231 = pneg %p36
        $region42: #{attention_forward.1} parent=39 // pred_check_branch
          %233 = sbr.rel (%p231) target = $region44
        $region43: #{attention_forward.1} parent=39 // pred_region
          %p234 = scmp.lt.s32.totalorder %s16, 1
          %s235 = scalar_select %p234, %s16, 1
          %s236 = smul.addr %s235, 2
          %s237 = smul.addr %s236, 8
          %s238 = scalar_lea.vmem %s0, %s237
        $region44: #{attention_forward.1} parent=39 // pred_fallthru
          _
      $region40: #{attention_forward.1} parent=5 // pred_fallthru
        _
      %p239 = scmp.le.s32.totalorder 1, %s16
      %p240 = scmp.lt.s32.totalorder %s16, 3
      %p241 = pnand %p239, %p240
      %p242 = pneg %p241
      // Predicated region
      $region45: #{attention_forward.1} parent=5 // pred_check
        _
      $region46: #{attention_forward.1} parent=5 // pred_check_branch
        %244 = sbr.rel (%p241) target = $region48
      $region47: #{attention_forward.1} parent=5 // pred_region
        %s245 = ssub.s32 %s16, 1
        %p246 = scmp.lt.s32.totalorder %s21, 1
        %s247 = scalar_select %p246, %s21, 1
        %s248 = smul.addr %s247, 2
        %s249 = smul.addr %s248, 8
        %s250 = scalar_lea.vmem %s0, %s249
        %p251 = pneg %p42
        %p252 = pneg %p39
        %p253 = pneg %p63
        %p254 = pneg %p60
        %p255 = pneg %p84
        %p256 = pneg %p81
        %p257 = pneg %p105
        %p258 = pneg %p102
        %p259 = pneg %p126
        %p260 = pneg %p123
        %p261 = pneg %p147
        %p262 = pneg %p144
        %p263 = pneg %p168
        %p264 = pneg %p165
        %p265 = pneg %p194
        %p266 = pneg %p191
        %s267 = sand.u32 %s181, 1
        %s268 = scalar_lea.sflag [#allocation3], %s267
        %s269 = sand.u32 %s181, 1
        %s270 = smul.addr %s269, 16
        %s271 = scalar_lea.vmem [#allocation2], %s270
        %p272 = scmp.lt.s32.totalorder %s21, 1
        %s273 = scalar_select %p272, %s21, 1
        %s274 = smul.addr %s273, 2
        %s275 = smul.addr %s274, 8
        %s276 = scalar_lea.vmem %s0, %s275
        %v277 = vld [vmem:[%s276] sm:$0xff]
        %v278 = vld [vmem:[%s276 + $0x8] sm:$0xff]
        %279 = vadd.xlane.f32.xlu0 %v277
        %v280 = vpop.xlane.xlu0 %279
        %281 = vadd.xlane.f32.xlu0 %v278
        %v282 = vpop.xlane.xlu0 %281
        %v283 = vrcp.pop 128.0
        %v284 = vmul.f32 %v280, %v283
        %v285 = vmul.f32 %v282, %v283
        %v286 = vsub.f32 %v277, %v284
        %v287 = vsub.f32 %v278, %v285
        %v288 = vmul.f32 %v286, %v286
        %v289 = vmul.f32 %v287, %v287
        %290 = vadd.xlane.f32.xlu0 %v288
        %v291 = vpop.xlane.xlu0 %290
        %292 = vadd.xlane.f32.xlu0 %v289
        %v293 = vpop.xlane.xlu0 %292
        %v294 = vmul.f32 %v291, %v283
        %v295 = vmul.f32 %v293, %v283
        %v296 = vadd.f32 %v294, 1e-05
        %v297 = vadd.f32 %v295, 1e-05
        %v298 = vrsqrt.pop %v296
        %v299 = vrsqrt.pop %v297
        %v300 = vmul.f32 %v286, %v298
        %v301 = vmul.f32 %v287, %v299
        %v302 = vld [vmem:[%s1] sm:$0x1]
        %v304 = vlaneseq
        %v305 = vshrl.u32 %v304, 7
        %v306 = vsub.s32 0, %v305
        %v307 = vrot.slane %v302, %v306
        %v309 = vmul.f32 %v300, %v307
        %v310 = vmul.f32 %v301, %v307
        %v311 = vld [vmem:[%s2] sm:$0x1]
        %v313 = vlaneseq
        %v314 = vshrl.u32 %v313, 7
        %v315 = vsub.s32 0, %v314
        %v316 = vrot.slane %v311, %v315
        %v318 = vadd.f32 %v309, %v316
        %v319 = vadd.f32 %v310, %v316
        %v320 = vld [vmem:[%s3] sm:$0xff]
        %v321 = vld [vmem:[%s3 + $0x8] sm:$0xff]
        %v322 = vld [vmem:[%s3 + $0x10] sm:$0xff]
        %v323 = vld [vmem:[%s3 + $0x18] sm:$0xff]
        %v324 = vld [vmem:[%s3 + $0x20] sm:$0xff]
        %v325 = vld [vmem:[%s3 + $0x28] sm:$0xff]
        %v326 = vld [vmem:[%s3 + $0x30] sm:$0xff]
        %v327 = vld [vmem:[%s3 + $0x38] sm:$0xff]
        %v328 = vld [vmem:[%s3 + $0x40] sm:$0xff]
        %v329 = vld [vmem:[%s3 + $0x48] sm:$0xff]
        %v330 = vld [vmem:[%s3 + $0x50] sm:$0xff]
        %v331 = vld [vmem:[%s3 + $0x58] sm:$0xff]
        %v332 = vld [vmem:[%s3 + $0x60] sm:$0xff]
        %v333 = vld [vmem:[%s3 + $0x68] sm:$0xff]
        %v334 = vld [vmem:[%s3 + $0x70] sm:$0xff]
        %v335 = vld [vmem:[%s3 + $0x78] sm:$0xff]
        %v336 = vld [vmem:[%s4] sm:$0x1]
        %v338 = vlaneseq
        %v339 = vshrl.u32 %v338, 7
        %v340 = vsub.s32 0, %v339
        %v341 = vrot.slane %v336, %v340
        %343 = vmatprep.subr.mxu0 0.0
        %344 = vmatpush1.msra.mxu0 %v320
        %345 = vmatprep.subr.mxu0 0.0
        %346 = vmatpush1.msra.mxu0 %v321
        %347 = vmatprep.subr.mxu0 0.0
        %348 = vmatpush1.msra.mxu0 %v322
        %349 = vmatprep.subr.mxu0 0.0
        %350 = vmatpush1.msra.mxu0 %v323
        %351 = vmatprep.subr.mxu0 0.0
        %352 = vmatpush1.msra.mxu0 %v324
        %353 = vmatprep.subr.mxu0 0.0
        %354 = vmatpush1.msra.mxu0 %v325
        %355 = vmatprep.subr.mxu0 0.0
        %356 = vmatpush1.msra.mxu0 %v326
        %357 = vmatprep.subr.mxu0 0.0
        %358 = vmatpush1.msra.mxu0 %v327
        %359 = vmatprep.subr.mxu0 0.0
        %360 = vmatpush1.msra.mxu0 %v328
        %361 = vmatprep.subr.mxu0 0.0
        %362 = vmatpush1.msra.mxu0 %v329
        %363 = vmatprep.subr.mxu0 0.0
        %364 = vmatpush1.msra.mxu0 %v330
        %365 = vmatprep.subr.mxu0 0.0
        %366 = vmatpush1.msra.mxu0 %v331
        %367 = vmatprep.subr.mxu0 0.0
        %368 = vmatpush1.msra.mxu0 %v332
        %369 = vmatprep.subr.mxu0 0.0
        %370 = vmatpush1.msra.mxu0 %v333
        %371 = vmatprep.subr.mxu0 0.0
        %372 = vmatpush1.msra.mxu0 %v334
        %373 = vmatprep.subr.mxu0 0.0
        %374 = vmatpush1.msra.mxu0 %v335
        %375 = vmatprep.subr.mxu0 0.0
        %376 = vmatpush1.msra.mxu0 0.0
        %377 = vmatprep.subr.mxu0 0.0
        %378 = vmatpush1.msra.mxu0 0.0
        %379 = vmatprep.subr.mxu0 0.0
        %380 = vmatpush1.msra.mxu0 0.0
        %381 = vmatprep.subr.mxu0 0.0
        %382 = vmatpush1.msra.mxu0 0.0
        %383 = vmatprep.subr.mxu0 0.0
        %384 = vmatpush1.msra.mxu0 0.0
        %385 = vmatprep.subr.mxu0 0.0
        %386 = vmatpush1.msra.mxu0 0.0
        %387 = vmatprep.subr.mxu0 0.0
        %388 = vmatpush1.msra.mxu0 0.0
        %389 = vmatprep.subr.mxu0 0.0
        %390 = vmatpush1.msra.mxu0 0.0
        %391 = vmatprep.subr.mxu0 0.0
        %392 = vmatpush1.msra.mxu0 0.0
        %393 = vmatprep.subr.mxu0 0.0
        %394 = vmatpush1.msra.mxu0 0.0
        %395 = vmatprep.subr.mxu0 0.0
        %396 = vmatpush1.msra.mxu0 0.0
        %397 = vmatprep.subr.mxu0 0.0
        %398 = vmatpush1.msra.mxu0 0.0
        %399 = vmatprep.subr.mxu0 0.0
        %400 = vmatpush1.msra.mxu0 0.0
        %401 = vmatprep.subr.mxu0 0.0
        %402 = vmatpush1.msra.mxu0 0.0
        %403 = vmatprep.subr.mxu0 0.0
        %404 = vmatpush1.msra.mxu0 0.0
        %405 = vmatprep.subr.mxu0 0.0
        %406 = vmatpush1.msra.mxu0 0.0
        %407 = vmatprep.mubr.f32.mxu0 0.0
        %408 = vmatmul.mubr.f32.gmra.mrb[0].mxu0 %v318
        %v409 = vpop.f32.mrb[0].mxu0
        %v410 = vadd.f32 %v341, %v409
        %v411 = vpop.f32.mrb[0].mxu0
        %412 = vmatprep.mubr.f32.mxu0 0.0
        %413 = vmatmul.mubr.f32.gmra.mrb[0].mxu0 %v319
        %v414 = vpop.f32.mrb[0].mxu0
        %v415 = vadd.f32 %v341, %v414
        %v416 = vpop.f32.mrb[0].mxu0
        %417 = vdwg.mxu0
        %s418 = scalar_lea.vmem %s3, 128
        %v419 = vld [vmem:[%s418] sm:$0xff]
        %v420 = vld [vmem:[%s418 + $0x8] sm:$0xff]
        %v421 = vld [vmem:[%s418 + $0x10] sm:$0xff]
        %v422 = vld [vmem:[%s418 + $0x18] sm:$0xff]
        %v423 = vld [vmem:[%s418 + $0x20] sm:$0xff]
        %v424 = vld [vmem:[%s418 + $0x28] sm:$0xff]
        %v425 = vld [vmem:[%s418 + $0x30] sm:$0xff]
        %v426 = vld [vmem:[%s418 + $0x38] sm:$0xff]
        %v427 = vld [vmem:[%s418 + $0x40] sm:$0xff]
        %v428 = vld [vmem:[%s418 + $0x48] sm:$0xff]
        %v429 = vld [vmem:[%s418 + $0x50] sm:$0xff]
        %v430 = vld [vmem:[%s418 + $0x58] sm:$0xff]
        %v431 = vld [vmem:[%s418 + $0x60] sm:$0xff]
        %v432 = vld [vmem:[%s418 + $0x68] sm:$0xff]
        %v433 = vld [vmem:[%s418 + $0x70] sm:$0xff]
        %v434 = vld [vmem:[%s418 + $0x78] sm:$0xff]
        %s435 = scalar_lea.vmem %s4, 1
        %v436 = vld [vmem:[%s435] sm:$0x1]
        %v438 = vlaneseq
        %v439 = vshrl.u32 %v438, 7
        %v440 = vsub.s32 0, %v439
        %v441 = vrot.slane %v436, %v440
        %443 = vmatprep.subr.mxu0 0.0
        %444 = vmatpush1.msra.mxu0 %v419
        %445 = vmatprep.subr.mxu0 0.0
        %446 = vmatpush1.msra.mxu0 %v420
        %447 = vmatprep.subr.mxu0 0.0
        %448 = vmatpush1.msra.mxu0 %v421
        %449 = vmatprep.subr.mxu0 0.0
        %450 = vmatpush1.msra.mxu0 %v422
        %451 = vmatprep.subr.mxu0 0.0
        %452 = vmatpush1.msra.mxu0 %v423
        %453 = vmatprep.subr.mxu0 0.0
        %454 = vmatpush1.msra.mxu0 %v424
        %455 = vmatprep.subr.mxu0 0.0
        %456 = vmatpush1.msra.mxu0 %v425
        %457 = vmatprep.subr.mxu0 0.0
        %458 = vmatpush1.msra.mxu0 %v426
        %459 = vmatprep.subr.mxu0 0.0
        %460 = vmatpush1.msra.mxu0 %v427
        %461 = vmatprep.subr.mxu0 0.0
        %462 = vmatpush1.msra.mxu0 %v428
        %463 = vmatprep.subr.mxu0 0.0
        %464 = vmatpush1.msra.mxu0 %v429
        %465 = vmatprep.subr.mxu0 0.0
        %466 = vmatpush1.msra.mxu0 %v430
        %467 = vmatprep.subr.mxu0 0.0
        %468 = vmatpush1.msra.mxu0 %v431
        %469 = vmatprep.subr.mxu0 0.0
        %470 = vmatpush1.msra.mxu0 %v432
        %471 = vmatprep.subr.mxu0 0.0
        %472 = vmatpush1.msra.mxu0 %v433
        %473 = vmatprep.subr.mxu0 0.0
        %474 = vmatpush1.msra.mxu0 %v434
        %475 = vmatprep.subr.mxu0 0.0
        %476 = vmatpush1.msra.mxu0 0.0
        %477 = vmatprep.subr.mxu0 0.0
        %478 = vmatpush1.msra.mxu0 0.0
        %479 = vmatprep.subr.mxu0 0.0
        %480 = vmatpush1.msra.mxu0 0.0
        %481 = vmatprep.subr.mxu0 0.0
        %482 = vmatpush1.msra.mxu0 0.0
        %483 = vmatprep.subr.mxu0 0.0
        %484 = vmatpush1.msra.mxu0 0.0
        %485 = vmatprep.subr.mxu0 0.0
        %486 = vmatpush1.msra.mxu0 0.0
        %487 = vmatprep.subr.mxu0 0.0
        %488 = vmatpush1.msra.mxu0 0.0
        %489 = vmatprep.subr.mxu0 0.0
        %490 = vmatpush1.msra.mxu0 0.0
        %491 = vmatprep.subr.mxu0 0.0
        %492 = vmatpush1.msra.mxu0 0.0
        %493 = vmatprep.subr.mxu0 0.0
        %494 = vmatpush1.msra.mxu0 0.0
        %495 = vmatprep.subr.mxu0 0.0
        %496 = vmatpush1.msra.mxu0 0.0
        %497 = vmatprep.subr.mxu0 0.0
        %498 = vmatpush1.msra.mxu0 0.0
        %499 = vmatprep.subr.mxu0 0.0
        %500 = vmatpush1.msra.mxu0 0.0
        %501 = vmatprep.subr.mxu0 0.0
        %502 = vmatpush1.msra.mxu0 0.0
        %503 = vmatprep.subr.mxu0 0.0
        %504 = vmatpush1.msra.mxu0 0.0
        %505 = vmatprep.subr.mxu0 0.0
        %506 = vmatpush1.msra.mxu0 0.0
        %507 = vmatprep.mubr.f32.mxu0 0.0
        %508 = vmatmul.mubr.f32.gmra.mrb[0].mxu0 %v318
        %v509 = vpop.f32.mrb[0].mxu0
        %v510 = vadd.f32 %v441, %v509
        %v511 = vpop.f32.mrb[0].mxu0
        %512 = vmatprep.mubr.f32.mxu0 0.0
        %513 = vmatmul.mubr.f32.gmra.mrb[0].mxu0 %v319
        %v514 = vpop.f32.mrb[0].mxu0
        %v515 = vadd.f32 %v441, %v514
        %v516 = vpop.f32.mrb[0].mxu0
        %517 = vdwg.mxu0
        %s518 = scalar_lea.vmem %s3, 256
        %v519 = vld [vmem:[%s518] sm:$0xff]
        %v520 = vld [vmem:[%s518 + $0x8] sm:$0xff]
        %v521 = vld [vmem:[%s518 + $0x10] sm:$0xff]
        %v522 = vld [vmem:[%s518 + $0x18] sm:$0xff]
        %v523 = vld [vmem:[%s518 + $0x20] sm:$0xff]
        %v524 = vld [vmem:[%s518 + $0x28] sm:$0xff]
        %v525 = vld [vmem:[%s518 + $0x30] sm:$0xff]
        %v526 = vld [vmem:[%s518 + $0x38] sm:$0xff]
        %v527 = vld [vmem:[%s518 + $0x40] sm:$0xff]
        %v528 = vld [vmem:[%s518 + $0x48] sm:$0xff]
        %v529 = vld [vmem:[%s518 + $0x50] sm:$0xff]
        %v530 = vld [vmem:[%s518 + $0x58] sm:$0xff]
        %v531 = vld [vmem:[%s518 + $0x60] sm:$0xff]
        %v532 = vld [vmem:[%s518 + $0x68] sm:$0xff]
        %v533 = vld [vmem:[%s518 + $0x70] sm:$0xff]
        %v534 = vld [vmem:[%s518 + $0x78] sm:$0xff]
        %s535 = scalar_lea.vmem %s4, 2
        %v536 = vld [vmem:[%s535] sm:$0x1]
        %v538 = vlaneseq
        %v539 = vshrl.u32 %v538, 7
        %v540 = vsub.s32 0, %v539
        %v541 = vrot.slane %v536, %v540
        %543 = vmatprep.subr.mxu0 0.0
        %544 = vmatpush1.msra.mxu0 %v519
        %545 = vmatprep.subr.mxu0 0.0
        %546 = vmatpush1.msra.mxu0 %v520
        %547 = vmatprep.subr.mxu0 0.0
        %548 = vmatpush1.msra.mxu0 %v521
        %549 = vmatprep.subr.mxu0 0.0
        %550 = vmatpush1.msra.mxu0 %v522
        %551 = vmatprep.subr.mxu0 0.0
        %552 = vmatpush1.msra.mxu0 %v523
        %553 = vmatprep.subr.mxu0 0.0
        %554 = vmatpush1.msra.mxu0 %v524
        %555 = vmatprep.subr.mxu0 0.0
        %556 = vmatpush1.msra.mxu0 %v525
        %557 = vmatprep.subr.mxu0 0.0
        %558 = vmatpush1.msra.mxu0 %v526
        %559 = vmatprep.subr.mxu0 0.0
        %560 = vmatpush1.msra.mxu0 %v527
        %561 = vmatprep.subr.mxu0 0.0
        %562 = vmatpush1.msra.mxu0 %v528
        %563 = vmatprep.subr.mxu0 0.0
        %564 = vmatpush1.msra.mxu0 %v529
        %565 = vmatprep.subr.mxu0 0.0
        %566 = vmatpush1.msra.mxu0 %v530
        %567 = vmatprep.subr.mxu0 0.0
        %568 = vmatpush1.msra.mxu0 %v531
        %569 = vmatprep.subr.mxu0 0.0
        %570 = vmatpush1.msra.mxu0 %v532
        %571 = vmatprep.subr.mxu0 0.0
        %572 = vmatpush1.msra.mxu0 %v533
        %573 = vmatprep.subr.mxu0 0.0
        %574 = vmatpush1.msra.mxu0 %v534
        %575 = vmatprep.subr.mxu0 0.0
        %576 = vmatpush1.msra.mxu0 0.0
        %577 = vmatprep.subr.mxu0 0.0
        %578 = vmatpush1.msra.mxu0 0.0
        %579 = vmatprep.subr.mxu0 0.0
        %580 = vmatpush1.msra.mxu0 0.0
        %581 = vmatprep.subr.mxu0 0.0
        %582 = vmatpush1.msra.mxu0 0.0
        %583 = vmatprep.subr.mxu0 0.0
        %584 = vmatpush1.msra.mxu0 0.0
        %585 = vmatprep.subr.mxu0 0.0
        %586 = vmatpush1.msra.mxu0 0.0
        %587 = vmatprep.subr.mxu0 0.0
        %588 = vmatpush1.msra.mxu0 0.0
        %589 = vmatprep.subr.mxu0 0.0
        %590 = vmatpush1.msra.mxu0 0.0
        %591 = vmatprep.subr.mxu0 0.0
        %592 = vmatpush1.msra.mxu0 0.0
        %593 = vmatprep.subr.mxu0 0.0
        %594 = vmatpush1.msra.mxu0 0.0
        %595 = vmatprep.subr.mxu0 0.0
        %596 = vmatpush1.msra.mxu0 0.0
        %597 = vmatprep.subr.mxu0 0.0
        %598 = vmatpush1.msra.mxu0 0.0
        %599 = vmatprep.subr.mxu0 0.0
        %600 = vmatpush1.msra.mxu0 0.0
        %601 = vmatprep.subr.mxu0 0.0
        %602 = vmatpush1.msra.mxu0 0.0
        %603 = vmatprep.subr.mxu0 0.0
        %604 = vmatpush1.msra.mxu0 0.0
        %605 = vmatprep.subr.mxu0 0.0
        %606 = vmatpush1.msra.mxu0 0.0
        %607 = vmatprep.mubr.f32.mxu0 0.0
        %608 = vmatmul.mubr.f32.gmra.mrb[0].mxu0 %v318
        %v609 = vpop.f32.mrb[0].mxu0
        %v610 = vadd.f32 %v541, %v609
        %v611 = vpop.f32.mrb[0].mxu0
        %612 = vmatprep.mubr.f32.mxu0 0.0
        %613 = vmatmul.mubr.f32.gmra.mrb[0].mxu0 %v319
        %v614 = vpop.f32.mrb[0].mxu0
        %v615 = vadd.f32 %v541, %v614
        %v616 = vpop.f32.mrb[0].mxu0
        %617 = vdwg.mxu0
        %vm618 = vcmask 261120
        %v620 = vsel %vm618, %v410, 0
        %v623 = vsel %vm618, %v415, 0
        %v626 = vsel %vm618, %v510, 0
        %v629 = vsel %vm618, %v515, 0
        %631 = vmatprep.subr.mxu0 0.0
        %632 = vmatpush1.xpose.msra.mxu0 %v626
        %633 = vmatprep.subr.mxu0 0.0
        %634 = vmatpush1.xpose.msra.mxu0 %v629
        %635 = vmatprep.subr.mxu0 0.0
        %636 = vmatpush1.xpose.msra.mxu0 0.0
        %637 = vmatprep.subr.mxu0 0.0
        %638 = vmatpush1.xpose.msra.mxu0 0.0
        %639 = vmatprep.subr.mxu0 0.0
        %640 = vmatpush1.xpose.msra.mxu0 0.0
        %641 = vmatprep.subr.mxu0 0.0
        %642 = vmatpush1.xpose.msra.mxu0 0.0
        %643 = vmatprep.subr.mxu0 0.0
        %644 = vmatpush1.xpose.msra.mxu0 0.0
        %645 = vmatprep.subr.mxu0 0.0
        %646 = vmatpush1.xpose.msra.mxu0 0.0
        %647 = vmatprep.subr.mxu0 0.0
        %648 = vmatpush1.xpose.msra.mxu0 0.0
        %649 = vmatprep.subr.mxu0 0.0
        %650 = vmatpush1.xpose.msra.mxu0 0.0
        %651 = vmatprep.subr.mxu0 0.0
        %652 = vmatpush1.xpose.msra.mxu0 0.0
        %653 = vmatprep.subr.mxu0 0.0
        %654 = vmatpush1.xpose.msra.mxu0 0.0
        %655 = vmatprep.subr.mxu0 0.0
        %656 = vmatpush1.xpose.msra.mxu0 0.0
        %657 = vmatprep.subr.mxu0 0.0
        %658 = vmatpush1.xpose.msra.mxu0 0.0
        %659 = vmatprep.subr.mxu0 0.0
        %660 = vmatpush1.xpose.msra.mxu0 0.0
        %661 = vmatprep.subr.mxu0 0.0
        %662 = vmatpush1.xpose.msra.mxu0 0.0
        %663 = vmatprep.subr.mxu0 0.0
        %664 = vmatpush1.xpose.msra.mxu0 0.0
        %665 = vmatprep.subr.mxu0 0.0
        %666 = vmatpush1.xpose.msra.mxu0 0.0
        %667 = vmatprep.subr.mxu0 0.0
        %668 = vmatpush1.xpose.msra.mxu0 0.0
        %669 = vmatprep.subr.mxu0 0.0
        %670 = vmatpush1.xpose.msra.mxu0 0.0
        %671 = vmatprep.subr.mxu0 0.0
        %672 = vmatpush1.xpose.msra.mxu0 0.0
        %673 = vmatprep.subr.mxu0 0.0
        %674 = vmatpush1.xpose.msra.mxu0 0.0
        %675 = vmatprep.subr.mxu0 0.0
        %676 = vmatpush1.xpose.msra.mxu0 0.0
        %677 = vmatprep.subr.mxu0 0.0
        %678 = vmatpush1.xpose.msra.mxu0 0.0
        %679 = vmatprep.subr.mxu0 0.0
        %680 = vmatpush1.xpose.msra.mxu0 0.0
        %681 = vmatprep.subr.mxu0 0.0
        %682 = vmatpush1.xpose.msra.mxu0 0.0
        %683 = vmatprep.subr.mxu0 0.0
        %684 = vmatpush1.xpose.msra.mxu0 0.0
        %685 = vmatprep.subr.mxu0 0.0
        %686 = vmatpush1.xpose.msra.mxu0 0.0
        %687 = vmatprep.subr.mxu0 0.0
        %688 = vmatpush1.xpose.msra.mxu0 0.0
        %689 = vmatprep.subr.mxu0 0.0
        %690 = vmatpush1.xpose.msra.mxu0 0.0
        %691 = vmatprep.subr.mxu0 0.0
        %692 = vmatpush1.xpose.msra.mxu0 0.0
        %693 = vmatprep.subr.mxu0 0.0
        %694 = vmatpush1.xpose.msra.mxu0 0.0
        %695 = vmatprep.mubr.f32.mxu0 0.0
        %696 = vmatmul.mubr.f32.gmra.mrb[0].mxu0 %v620
        %v697 = vpop.f32.mrb[0].mxu0
        %v698 = vadd.f32 0.0, %v697
        %v699 = vpop.f32.mrb[0].mxu0
        %700 = vmatprep.mubr.f32.mxu0 0.0
        %701 = vmatmul.mubr.f32.gmra.mrb[0].mxu0 %v623
        %v702 = vpop.f32.mrb[0].mxu0
        %v703 = vadd.f32 0.0, %v702
        %v704 = vpop.f32.mrb[0].mxu0
        %705 = vdwg.mxu0
        %v706 = vmul.f32 %v698, 0.17677669
        %v707 = vmul.f32 %v703, 0.17677669
        %vm708 = vcmask 130048
        %v709 = vsel %vm708, %v706, -inf
        %710 = vmax.xlane.f32.xlu0 %v709
        %v711 = vpop.xlane.xlu0 %710
        %v712 = vsel %vm708, %v707, -inf
        %713 = vmax.xlane.f32.xlu0 %v712
        %v714 = vpop.xlane.xlu0 %713
        %v715 = vsub.f32 %v706, %v711
        %v716 = vsub.f32 %v707, %v714
        %v717 = vmul.f32 %v715, 1.442695
        %v718 = vpow.pop %v717
        %v719 = vmul.f32 %v716, 1.442695
        %v720 = vpow.pop %v719
        %v721 = vsel %vm708, %v718, 0.0
        %722 = vadd.xlane.f32.xlu0 %v721
        %v723 = vpop.xlane.xlu0 %722
        %v724 = vsel %vm708, %v720, 0.0
        %725 = vadd.xlane.f32.xlu0 %v724
        %v726 = vpop.xlane.xlu0 %725
        %v727 = vrcp.pop %v723
        %v728 = vmul.f32 %v718, %v727
        %v729 = vrcp.pop %v726
        %v730 = vmul.f32 %v720, %v729
        %v732 = vsel %vm708, %v728, 0
        %v735 = vsel %vm708, %v730, 0
        %737 = vmatprep.subr.mxu0 0.0
        %738 = vmatpush1.msra.mxu0 %v610
        %739 = vmatprep.subr.mxu0 0.0
        %740 = vmatpush1.msra.mxu0 %v615
        %741 = vmatprep.subr.mxu0 0.0
        %742 = vmatpush1.msra.mxu0 0.0
        %743 = vmatprep.subr.mxu0 0.0
        %744 = vmatpush1.msra.mxu0 0.0
        %745 = vmatprep.subr.mxu0 0.0
        %746 = vmatpush1.msra.mxu0 0.0
        %747 = vmatprep.subr.mxu0 0.0
        %748 = vmatpush1.msra.mxu0 0.0
        %749 = vmatprep.subr.mxu0 0.0
        %750 = vmatpush1.msra.mxu0 0.0
        %751 = vmatprep.subr.mxu0 0.0
        %752 = vmatpush1.msra.mxu0 0.0
        %753 = vmatprep.subr.mxu0 0.0
        %754 = vmatpush1.msra.mxu0 0.0
        %755 = vmatprep.subr.mxu0 0.0
        %756 = vmatpush1.msra.mxu0 0.0
        %757 = vmatprep.subr.mxu0 0.0
        %758 = vmatpush1.msra.mxu0 0.0
        %759 = vmatprep.subr.mxu0 0.0
        %760 = vmatpush1.msra.mxu0 0.0
        %761 = vmatprep.subr.mxu0 0.0
        %762 = vmatpush1.msra.mxu0 0.0
        %763 = vmatprep.subr.mxu0 0.0
        %764 = vmatpush1.msra.mxu0 0.0
        %765 = vmatprep.subr.mxu0 0.0
        %766 = vmatpush1.msra.mxu0 0.0
        %767 = vmatprep.subr.mxu0 0.0
        %768 = vmatpush1.msra.mxu0 0.0
        %769 = vmatprep.subr.mxu0 0.0
        %770 = vmatpush1.msra.mxu0 0.0
        %771 = vmatprep.subr.mxu0 0.0
        %772 = vmatpush1.msra.mxu0 0.0
        %773 = vmatprep.subr.mxu0 0.0
        %774 = vmatpush1.msra.mxu0 0.0
        %775 = vmatprep.subr.mxu0 0.0
        %776 = vmatpush1.msra.mxu0 0.0
        %777 = vmatprep.subr.mxu0 0.0
        %778 = vmatpush1.msra.mxu0 0.0
        %779 = vmatprep.subr.mxu0 0.0
        %780 = vmatpush1.msra.mxu0 0.0
        %781 = vmatprep.subr.mxu0 0.0
        %782 = vmatpush1.msra.mxu0 0.0
        %783 = vmatprep.subr.mxu0 0.0
        %784 = vmatpush1.msra.mxu0 0.0
        %785 = vmatprep.subr.mxu0 0.0
        %786 = vmatpush1.msra.mxu0 0.0
        %787 = vmatprep.subr.mxu0 0.0
        %788 = vmatpush1.msra.mxu0 0.0
        %789 = vmatprep.subr.mxu0 0.0
        %790 = vmatpush1.msra.mxu0 0.0
        %791 = vmatprep.subr.mxu0 0.0
        %792 = vmatpush1.msra.mxu0 0.0
        %793 = vmatprep.subr.mxu0 0.0
        %794 = vmatpush1.msra.mxu0 0.0
        %795 = vmatprep.subr.mxu0 0.0
        %796 = vmatpush1.msra.mxu0 0.0
        %797 = vmatprep.subr.mxu0 0.0
        %798 = vmatpush1.msra.mxu0 0.0
        %799 = vmatprep.subr.mxu0 0.0
        %800 = vmatpush1.msra.mxu0 0.0
        %801 = vmatprep.mubr.f32.mxu0 0.0
        %802 = vmatmul.mubr.f32.gmra.mrb[0].mxu0 %v732
        %v803 = vpop.f32.mrb[0].mxu0
        %v804 = vadd.f32 0.0, %v803
        %v805 = vpop.f32.mrb[0].mxu0
        %806 = vmatprep.mubr.f32.mxu0 0.0
        %807 = vmatmul.mubr.f32.gmra.mrb[0].mxu0 %v735
        %v808 = vpop.f32.mrb[0].mxu0
        %v809 = vadd.f32 0.0, %v808
        %v810 = vpop.f32.mrb[0].mxu0
        %811 = vdwg.mxu0
        %812 = vrot.lane.b32.xlu0 %v410, 96
        %v813 = vpop.permute.xlu0 %812
        %814 = vrot.lane.b32.xlu0 %v415, 96
        %v815 = vpop.permute.xlu0 %814
        %816 = vrot.lane.b32.xlu0 %v510, 96
        %v817 = vpop.permute.xlu0 %816
        %818 = vrot.lane.b32.xlu0 %v515, 96
        %v819 = vpop.permute.xlu0 %818
        %v820 = vsel %vm618, %v813, 0
        %v822 = vsel %vm618, %v815, 0
        %v824 = vsel %vm618, %v817, 0
        %v826 = vsel %vm618, %v819, 0
        %828 = vmatprep.subr.mxu0 0.0
        %829 = vmatpush1.xpose.msra.mxu0 %v824
        %830 = vmatprep.subr.mxu0 0.0
        %831 = vmatpush1.xpose.msra.mxu0 %v826
        %832 = vmatprep.subr.mxu0 0.0
        %833 = vmatpush1.xpose.msra.mxu0 0.0
        %834 = vmatprep.subr.mxu0 0.0
        %835 = vmatpush1.xpose.msra.mxu0 0.0
        %836 = vmatprep.subr.mxu0 0.0
        %837 = vmatpush1.xpose.msra.mxu0 0.0
        %838 = vmatprep.subr.mxu0 0.0
        %839 = vmatpush1.xpose.msra.mxu0 0.0
        %840 = vmatprep.subr.mxu0 0.0
        %841 = vmatpush1.xpose.msra.mxu0 0.0
        %842 = vmatprep.subr.mxu0 0.0
        %843 = vmatpush1.xpose.msra.mxu0 0.0
        %844 = vmatprep.subr.mxu0 0.0
        %845 = vmatpush1.xpose.msra.mxu0 0.0
        %846 = vmatprep.subr.mxu0 0.0
        %847 = vmatpush1.xpose.msra.mxu0 0.0
        %848 = vmatprep.subr.mxu0 0.0
        %849 = vmatpush1.xpose.msra.mxu0 0.0
        %850 = vmatprep.subr.mxu0 0.0
        %851 = vmatpush1.xpose.msra.mxu0 0.0
        %852 = vmatprep.subr.mxu0 0.0
        %853 = vmatpush1.xpose.msra.mxu0 0.0
        %854 = vmatprep.subr.mxu0 0.0
        %855 = vmatpush1.xpose.msra.mxu0 0.0
        %856 = vmatprep.subr.mxu0 0.0
        %857 = vmatpush1.xpose.msra.mxu0 0.0
        %858 = vmatprep.subr.mxu0 0.0
        %859 = vmatpush1.xpose.msra.mxu0 0.0
        %860 = vmatprep.subr.mxu0 0.0
        %861 = vmatpush1.xpose.msra.mxu0 0.0
        %862 = vmatprep.subr.mxu0 0.0
        %863 = vmatpush1.xpose.msra.mxu0 0.0
        %864 = vmatprep.subr.mxu0 0.0
        %865 = vmatpush1.xpose.msra.mxu0 0.0
        %866 = vmatprep.subr.mxu0 0.0
        %867 = vmatpush1.xpose.msra.mxu0 0.0
        %868 = vmatprep.subr.mxu0 0.0
        %869 = vmatpush1.xpose.msra.mxu0 0.0
        %870 = vmatprep.subr.mxu0 0.0
        %871 = vmatpush1.xpose.msra.mxu0 0.0
        %872 = vmatprep.subr.mxu0 0.0
        %873 = vmatpush1.xpose.msra.mxu0 0.0
        %874 = vmatprep.subr.mxu0 0.0
        %875 = vmatpush1.xpose.msra.mxu0 0.0
        %876 = vmatprep.subr.mxu0 0.0
        %877 = vmatpush1.xpose.msra.mxu0 0.0
        %878 = vmatprep.subr.mxu0 0.0
        %879 = vmatpush1.xpose.msra.mxu0 0.0
        %880 = vmatprep.subr.mxu0 0.0
        %881 = vmatpush1.xpose.msra.mxu0 0.0
        %882 = vmatprep.subr.mxu0 0.0
        %883 = vmatpush1.xpose.msra.mxu0 0.0
        %884 = vmatprep.subr.mxu0 0.0
        %885 = vmatpush1.xpose.msra.mxu0 0.0
        %886 = vmatprep.subr.mxu0 0.0
        %887 = vmatpush1.xpose.msra.mxu0 0.0
        %888 = vmatprep.subr.mxu0 0.0
        %889 = vmatpush1.xpose.msra.mxu0 0.0
        %890 = vmatprep.subr.mxu0 0.0
        %891 = vmatpush1.xpose.msra.mxu0 0.0
        %892 = vmatprep.mubr.f32.mxu0 0.0
        %893 = vmatmul.mubr.f32.gmra.mrb[0].mxu0 %v820
        %v894 = vpop.f32.mrb[0].mxu0
        %v895 = vadd.f32 0.0, %v894
        %v896 = vpop.f32.mrb[0].mxu0
        %897 = vmatprep.mubr.f32.mxu0 0.0
        %898 = vmatmul.mubr.f32.gmra.mrb[0].mxu0 %v822
        %v899 = vpop.f32.mrb[0].mxu0
        %v900 = vadd.f32 0.0, %v899
        %v901 = vpop.f32.mrb[0].mxu0
        %902 = vdwg.mxu0
        %v903 = vmul.f32 %v895, 0.17677669
        %v904 = vmul.f32 %v900, 0.17677669
        %v905 = vsel %vm708, %v903, -inf
        %906 = vmax.xlane.f32.xlu0 %v905
        %v907 = vpop.xlane.xlu0 %906
        %v908 = vsel %vm708, %v904, -inf
        %909 = vmax.xlane.f32.xlu0 %v908
        %v910 = vpop.xlane.xlu0 %909
        %v911 = vsub.f32 %v903, %v907
        %v912 = vsub.f32 %v904, %v910
        %v913 = vmul.f32 %v911, 1.442695
        %v914 = vpow.pop %v913
        %v915 = vmul.f32 %v912, 1.442695
        %v916 = vpow.pop %v915
        %v917 = vsel %vm708, %v914, 0.0
        %918 = vadd.xlane.f32.xlu0 %v917
        %v919 = vpop.xlane.xlu0 %918
        %v920 = vsel %vm708, %v916, 0.0
        %921 = vadd.xlane.f32.xlu0 %v920
        %v922 = vpop.xlane.xlu0 %921
        %v923 = vrcp.pop %v919
        %v924 = vmul.f32 %v914, %v923
        %v925 = vrcp.pop %v922
        %v926 = vmul.f32 %v916, %v925
        %929 = vrot.lane.b32.xlu0 %v610, 96
        %v930 = vpop.permute.xlu0 %929
        %931 = vrot.lane.b32.xlu0 %v615, 96
        %v932 = vpop.permute.xlu0 %931
        %v936 = vsel %vm708, %v924, 0
        %v939 = vsel %vm708, %v926, 0
        %941 = vmatprep.subr.mxu0 0.0
        %942 = vmatpush1.msra.mxu0 %v930
        %943 = vmatprep.subr.mxu0 0.0
        %944 = vmatpush1.msra.mxu0 %v932
        %945 = vmatprep.subr.mxu0 0.0
        %946 = vmatpush1.msra.mxu0 0.0
        %947 = vmatprep.subr.mxu0 0.0
        %948 = vmatpush1.msra.mxu0 0.0
        %949 = vmatprep.subr.mxu0 0.0
        %950 = vmatpush1.msra.mxu0 0.0
        %951 = vmatprep.subr.mxu0 0.0
        %952 = vmatpush1.msra.mxu0 0.0
        %953 = vmatprep.subr.mxu0 0.0
        %954 = vmatpush1.msra.mxu0 0.0
        %955 = vmatprep.subr.mxu0 0.0
        %956 = vmatpush1.msra.mxu0 0.0
        %957 = vmatprep.subr.mxu0 0.0
        %958 = vmatpush1.msra.mxu0 0.0
        %959 = vmatprep.subr.mxu0 0.0
        %960 = vmatpush1.msra.mxu0 0.0
        %961 = vmatprep.subr.mxu0 0.0
        %962 = vmatpush1.msra.mxu0 0.0
        %963 = vmatprep.subr.mxu0 0.0
        %964 = vmatpush1.msra.mxu0 0.0
        %965 = vmatprep.subr.mxu0 0.0
        %966 = vmatpush1.msra.mxu0 0.0
        %967 = vmatprep.subr.mxu0 0.0
        %968 = vmatpush1.msra.mxu0 0.0
        %969 = vmatprep.subr.mxu0 0.0
        %970 = vmatpush1.msra.mxu0 0.0
        %971 = vmatprep.subr.mxu0 0.0
        %972 = vmatpush1.msra.mxu0 0.0
        %973 = vmatprep.subr.mxu0 0.0
        %974 = vmatpush1.msra.mxu0 0.0
        %975 = vmatprep.subr.mxu0 0.0
        %976 = vmatpush1.msra.mxu0 0.0
        %977 = vmatprep.subr.mxu0 0.0
        %978 = vmatpush1.msra.mxu0 0.0
        %979 = vmatprep.subr.mxu0 0.0
        %980 = vmatpush1.msra.mxu0 0.0
        %981 = vmatprep.subr.mxu0 0.0
        %982 = vmatpush1.msra.mxu0 0.0
        %983 = vmatprep.subr.mxu0 0.0
        %984 = vmatpush1.msra.mxu0 0.0
        %985 = vmatprep.subr.mxu0 0.0
        %986 = vmatpush1.msra.mxu0 0.0
        %987 = vmatprep.subr.mxu0 0.0
        %988 = vmatpush1.msra.mxu0 0.0
        %989 = vmatprep.subr.mxu0 0.0
        %990 = vmatpush1.msra.mxu0 0.0
        %991 = vmatprep.subr.mxu0 0.0
        %992 = vmatpush1.msra.mxu0 0.0
        %993 = vmatprep.subr.mxu0 0.0
        %994 = vmatpush1.msra.mxu0 0.0
        %995 = vmatprep.subr.mxu0 0.0
        %996 = vmatpush1.msra.mxu0 0.0
        %997 = vmatprep.subr.mxu0 0.0
        %998 = vmatpush1.msra.mxu0 0.0
        %999 = vmatprep.subr.mxu0 0.0
        %1000 = vmatpush1.msra.mxu0 0.0
        %1001 = vmatprep.subr.mxu0 0.0
        %1002 = vmatpush1.msra.mxu0 0.0
        %1003 = vmatprep.subr.mxu0 0.0
        %1004 = vmatpush1.msra.mxu0 0.0
        %1005 = vmatprep.mubr.f32.mxu0 0.0
        %1006 = vmatmul.mubr.f32.gmra.mrb[0].mxu0 %v936
        %v1007 = vpop.f32.mrb[0].mxu0
        %v1008 = vadd.f32 0.0, %v1007
        %v1009 = vpop.f32.mrb[0].mxu0
        %1010 = vmatprep.mubr.f32.mxu0 0.0
        %1011 = vmatmul.mubr.f32.gmra.mrb[0].mxu0 %v939
        %v1012 = vpop.f32.mrb[0].mxu0
        %v1013 = vadd.f32 0.0, %v1012
        %v1014 = vpop.f32.mrb[0].mxu0
        %1015 = vdwg.mxu0
        %1016 = vrot.lane.b32.xlu0 %v410, 64
        %v1017 = vpop.permute.xlu0 %1016
        %1018 = vrot.lane.b32.xlu0 %v415, 64
        %v1019 = vpop.permute.xlu0 %1018
        %1020 = vrot.lane.b32.xlu0 %v510, 64
        %v1021 = vpop.permute.xlu0 %1020
        %1022 = vrot.lane.b32.xlu0 %v515, 64
        %v1023 = vpop.permute.xlu0 %1022
        %v1024 = vsel %vm618, %v1017, 0
        %v1026 = vsel %vm618, %v1019, 0
        %v1028 = vsel %vm618, %v1021, 0
        %v1030 = vsel %vm618, %v1023, 0
        %1032 = vmatprep.subr.mxu0 0.0
        %1033 = vmatpush1.xpose.msra.mxu0 %v1028
        %1034 = vmatprep.subr.mxu0 0.0
        %1035 = vmatpush1.xpose.msra.mxu0 %v1030
        %1036 = vmatprep.subr.mxu0 0.0
        %1037 = vmatpush1.xpose.msra.mxu0 0.0
        %1038 = vmatprep.subr.mxu0 0.0
        %1039 = vmatpush1.xpose.msra.mxu0 0.0
        %1040 = vmatprep.subr.mxu0 0.0
        %1041 = vmatpush1.xpose.msra.mxu0 0.0
        %1042 = vmatprep.subr.mxu0 0.0
        %1043 = vmatpush1.xpose.msra.mxu0 0.0
        %1044 = vmatprep.subr.mxu0 0.0
        %1045 = vmatpush1.xpose.msra.mxu0 0.0
        %1046 = vmatprep.subr.mxu0 0.0
        %1047 = vmatpush1.xpose.msra.mxu0 0.0
        %1048 = vmatprep.subr.mxu0 0.0
        %1049 = vmatpush1.xpose.msra.mxu0 0.0
        %1050 = vmatprep.subr.mxu0 0.0
        %1051 = vmatpush1.xpose.msra.mxu0 0.0
        %1052 = vmatprep.subr.mxu0 0.0
        %1053 = vmatpush1.xpose.msra.mxu0 0.0
        %1054 = vmatprep.subr.mxu0 0.0
        %1055 = vmatpush1.xpose.msra.mxu0 0.0
        %1056 = vmatprep.subr.mxu0 0.0
        %1057 = vmatpush1.xpose.msra.mxu0 0.0
        %1058 = vmatprep.subr.mxu0 0.0
        %1059 = vmatpush1.xpose.msra.mxu0 0.0
        %1060 = vmatprep.subr.mxu0 0.0
        %1061 = vmatpush1.xpose.msra.mxu0 0.0
        %1062 = vmatprep.subr.mxu0 0.0
        %1063 = vmatpush1.xpose.msra.mxu0 0.0
        %1064 = vmatprep.subr.mxu0 0.0
        %1065 = vmatpush1.xpose.msra.mxu0 0.0
        %1066 = vmatprep.subr.mxu0 0.0
        %1067 = vmatpush1.xpose.msra.mxu0 0.0
        %1068 = vmatprep.subr.mxu0 0.0
        %1069 = vmatpush1.xpose.msra.mxu0 0.0
        %1070 = vmatprep.subr.mxu0 0.0
        %1071 = vmatpush1.xpose.msra.mxu0 0.0
        %1072 = vmatprep.subr.mxu0 0.0
        %1073 = vmatpush1.xpose.msra.mxu0 0.0
        %1074 = vmatprep.subr.mxu0 0.0
        %1075 = vmatpush1.xpose.msra.mxu0 0.0
        %1076 = vmatprep.subr.mxu0 0.0
        %1077 = vmatpush1.xpose.msra.mxu0 0.0
        %1078 = vmatprep.subr.mxu0 0.0
        %1079 = vmatpush1.xpose.msra.mxu0 0.0
        %1080 = vmatprep.subr.mxu0 0.0
        %1081 = vmatpush1.xpose.msra.mxu0 0.0
        %1082 = vmatprep.subr.mxu0 0.0
        %1083 = vmatpush1.xpose.msra.mxu0 0.0
        %1084 = vmatprep.subr.mxu0 0.0
        %1085 = vmatpush1.xpose.msra.mxu0 0.0
        %1086 = vmatprep.subr.mxu0 0.0
        %1087 = vmatpush1.xpose.msra.mxu0 0.0
        %1088 = vmatprep.subr.mxu0 0.0
        %1089 = vmatpush1.xpose.msra.mxu0 0.0
        %1090 = vmatprep.subr.mxu0 0.0
        %1091 = vmatpush1.xpose.msra.mxu0 0.0
        %1092 = vmatprep.subr.mxu0 0.0
        %1093 = vmatpush1.xpose.msra.mxu0 0.0
        %1094 = vmatprep.subr.mxu0 0.0
        %1095 = vmatpush1.xpose.msra.mxu0 0.0
        %1096 = vmatprep.mubr.f32.mxu0 0.0
        %1097 = vmatmul.mubr.f32.gmra.mrb[0].mxu0 %v1024
        %v1098 = vpop.f32.mrb[0].mxu0
        %v1099 = vadd.f32 0.0, %v1098
        %v1100 = vpop.f32.mrb[0].mxu0
        %1101 = vmatprep.mubr.f32.mxu0 0.0
        %1102 = vmatmul.mubr.f32.gmra.mrb[0].mxu0 %v1026
        %v1103 = vpop.f32.mrb[0].mxu0
        %v1104 = vadd.f32 0.0, %v1103
        %v1105 = vpop.f32.mrb[0].mxu0
        %1106 = vdwg.mxu0
        %v1107 = vmul.f32 %v1099, 0.17677669
        %v1108 = vmul.f32 %v1104, 0.17677669
        %v1109 = vsel %vm708, %v1107, -inf
        %1110 = vmax.xlane.f32.xlu0 %v1109
        %v1111 = vpop.xlane.xlu0 %1110
        %v1112 = vsel %vm708, %v1108, -inf
        %1113 = vmax.xlane.f32.xlu0 %v1112
        %v1114 = vpop.xlane.xlu0 %1113
        %v1115 = vsub.f32 %v1107, %v1111
        %v1116 = vsub.f32 %v1108, %v1114
        %v1117 = vmul.f32 %v1115, 1.442695
        %v1118 = vpow.pop %v1117
        %v1119 = vmul.f32 %v1116, 1.442695
        %v1120 = vpow.pop %v1119
        %v1121 = vsel %vm708, %v1118, 0.0
        %1122 = vadd.xlane.f32.xlu0 %v1121
        %v1123 = vpop.xlane.xlu0 %1122
        %v1124 = vsel %vm708, %v1120, 0.0
        %1125 = vadd.xlane.f32.xlu0 %v1124
        %v1126 = vpop.xlane.xlu0 %1125
        %v1127 = vrcp.pop %v1123
        %v1128 = vmul.f32 %v1118, %v1127
        %v1129 = vrcp.pop %v1126
        %v1130 = vmul.f32 %v1120, %v1129
        %1131 = vrot.lane.b32.xlu0 %v610, 64
        %v1132 = vpop.permute.xlu0 %1131
        %1133 = vrot.lane.b32.xlu0 %v615, 64
        %v1134 = vpop.permute.xlu0 %1133
        %v1138 = vsel %vm708, %v1128, 0
        %v1141 = vsel %vm708, %v1130, 0
        %1143 = vmatprep.subr.mxu0 0.0
        %1144 = vmatpush1.msra.mxu0 %v1132
        %1145 = vmatprep.subr.mxu0 0.0
        %1146 = vmatpush1.msra.mxu0 %v1134
        %1147 = vmatprep.subr.mxu0 0.0
        %1148 = vmatpush1.msra.mxu0 0.0
        %1149 = vmatprep.subr.mxu0 0.0
        %1150 = vmatpush1.msra.mxu0 0.0
        %1151 = vmatprep.subr.mxu0 0.0
        %1152 = vmatpush1.msra.mxu0 0.0
        %1153 = vmatprep.subr.mxu0 0.0
        %1154 = vmatpush1.msra.mxu0 0.0
        %1155 = vmatprep.subr.mxu0 0.0
        %1156 = vmatpush1.msra.mxu0 0.0
        %1157 = vmatprep.subr.mxu0 0.0
        %1158 = vmatpush1.msra.mxu0 0.0
        %1159 = vmatprep.subr.mxu0 0.0
        %1160 = vmatpush1.msra.mxu0 0.0
        %1161 = vmatprep.subr.mxu0 0.0
        %1162 = vmatpush1.msra.mxu0 0.0
        %1163 = vmatprep.subr.mxu0 0.0
        %1164 = vmatpush1.msra.mxu0 0.0
        %1165 = vmatprep.subr.mxu0 0.0
        %1166 = vmatpush1.msra.mxu0 0.0
        %1167 = vmatprep.subr.mxu0 0.0
        %1168 = vmatpush1.msra.mxu0 0.0
        %1169 = vmatprep.subr.mxu0 0.0
        %1170 = vmatpush1.msra.mxu0 0.0
        %1171 = vmatprep.subr.mxu0 0.0
        %1172 = vmatpush1.msra.mxu0 0.0
        %1173 = vmatprep.subr.mxu0 0.0
        %1174 = vmatpush1.msra.mxu0 0.0
        %1175 = vmatprep.subr.mxu0 0.0
        %1176 = vmatpush1.msra.mxu0 0.0
        %1177 = vmatprep.subr.mxu0 0.0
        %1178 = vmatpush1.msra.mxu0 0.0
        %1179 = vmatprep.subr.mxu0 0.0
        %1180 = vmatpush1.msra.mxu0 0.0
        %1181 = vmatprep.subr.mxu0 0.0
        %1182 = vmatpush1.msra.mxu0 0.0
        %1183 = vmatprep.subr.mxu0 0.0
        %1184 = vmatpush1.msra.mxu0 0.0
        %1185 = vmatprep.subr.mxu0 0.0
        %1186 = vmatpush1.msra.mxu0 0.0
        %1187 = vmatprep.subr.mxu0 0.0
        %1188 = vmatpush1.msra.mxu0 0.0
        %1189 = vmatprep.subr.mxu0 0.0
        %1190 = vmatpush1.msra.mxu0 0.0
        %1191 = vmatprep.subr.mxu0 0.0
        %1192 = vmatpush1.msra.mxu0 0.0
        %1193 = vmatprep.subr.mxu0 0.0
        %1194 = vmatpush1.msra.mxu0 0.0
        %1195 = vmatprep.subr.mxu0 0.0
        %1196 = vmatpush1.msra.mxu0 0.0
        %1197 = vmatprep.subr.mxu0 0.0
        %1198 = vmatpush1.msra.mxu0 0.0
        %1199 = vmatprep.subr.mxu0 0.0
        %1200 = vmatpush1.msra.mxu0 0.0
        %1201 = vmatprep.subr.mxu0 0.0
        %1202 = vmatpush1.msra.mxu0 0.0
        %1203 = vmatprep.subr.mxu0 0.0
        %1204 = vmatpush1.msra.mxu0 0.0
        %1205 = vmatprep.subr.mxu0 0.0
        %1206 = vmatpush1.msra.mxu0 0.0
        %1207 = vmatprep.mubr.f32.mxu0 0.0
        %1208 = vmatmul.mubr.f32.gmra.mrb[0].mxu0 %v1138
        %v1209 = vpop.f32.mrb[0].mxu0
        %v1210 = vadd.f32 0.0, %v1209
        %v1211 = vpop.f32.mrb[0].mxu0
        %1212 = vmatprep.mubr.f32.mxu0 0.0
        %1213 = vmatmul.mubr.f32.gmra.mrb[0].mxu0 %v1141
        %v1214 = vpop.f32.mrb[0].mxu0
        %v1215 = vadd.f32 0.0, %v1214
        %v1216 = vpop.f32.mrb[0].mxu0
        %1217 = vdwg.mxu0
        %1218 = vrot.lane.b32.xlu0 %v410, 32
        %v1219 = vpop.permute.xlu0 %1218
        %1220 = vrot.lane.b32.xlu0 %v415, 32
        %v1221 = vpop.permute.xlu0 %1220
        %1222 = vrot.lane.b32.xlu0 %v510, 32
        %v1223 = vpop.permute.xlu0 %1222
        %1224 = vrot.lane.b32.xlu0 %v515, 32
        %v1225 = vpop.permute.xlu0 %1224
        %v1226 = vsel %vm618, %v1219, 0
        %v1228 = vsel %vm618, %v1221, 0
        %v1230 = vsel %vm618, %v1223, 0
        %v1232 = vsel %vm618, %v1225, 0
        %1234 = vmatprep.subr.mxu0 0.0
        %1235 = vmatpush1.xpose.msra.mxu0 %v1230
        %1236 = vmatprep.subr.mxu0 0.0
        %1237 = vmatpush1.xpose.msra.mxu0 %v1232
        %1238 = vmatprep.subr.mxu0 0.0
        %1239 = vmatpush1.xpose.msra.mxu0 0.0
        %1240 = vmatprep.subr.mxu0 0.0
        %1241 = vmatpush1.xpose.msra.mxu0 0.0
        %1242 = vmatprep.subr.mxu0 0.0
        %1243 = vmatpush1.xpose.msra.mxu0 0.0
        %1244 = vmatprep.subr.mxu0 0.0
        %1245 = vmatpush1.xpose.msra.mxu0 0.0
        %1246 = vmatprep.subr.mxu0 0.0
        %1247 = vmatpush1.xpose.msra.mxu0 0.0
        %1248 = vmatprep.subr.mxu0 0.0
        %1249 = vmatpush1.xpose.msra.mxu0 0.0
        %1250 = vmatprep.subr.mxu0 0.0
        %1251 = vmatpush1.xpose.msra.mxu0 0.0
        %1252 = vmatprep.subr.mxu0 0.0
        %1253 = vmatpush1.xpose.msra.mxu0 0.0
        %1254 = vmatprep.subr.mxu0 0.0
        %1255 = vmatpush1.xpose.msra.mxu0 0.0
        %1256 = vmatprep.subr.mxu0 0.0
        %1257 = vmatpush1.xpose.msra.mxu0 0.0
        %1258 = vmatprep.subr.mxu0 0.0
        %1259 = vmatpush1.xpose.msra.mxu0 0.0
        %1260 = vmatprep.subr.mxu0 0.0
        %1261 = vmatpush1.xpose.msra.mxu0 0.0
        %1262 = vmatprep.subr.mxu0 0.0
        %1263 = vmatpush1.xpose.msra.mxu0 0.0
        %1264 = vmatprep.subr.mxu0 0.0
        %1265 = vmatpush1.xpose.msra.mxu0 0.0
        %1266 = vmatprep.subr.mxu0 0.0
        %1267 = vmatpush1.xpose.msra.mxu0 0.0
        %1268 = vmatprep.subr.mxu0 0.0
        %1269 = vmatpush1.xpose.msra.mxu0 0.0
        %1270 = vmatprep.subr.mxu0 0.0
        %1271 = vmatpush1.xpose.msra.mxu0 0.0
        %1272 = vmatprep.subr.mxu0 0.0
        %1273 = vmatpush1.xpose.msra.mxu0 0.0
        %1274 = vmatprep.subr.mxu0 0.0
        %1275 = vmatpush1.xpose.msra.mxu0 0.0
        %1276 = vmatprep.subr.mxu0 0.0
        %1277 = vmatpush1.xpose.msra.mxu0 0.0
        %1278 = vmatprep.subr.mxu0 0.0
        %1279 = vmatpush1.xpose.msra.mxu0 0.0
        %1280 = vmatprep.subr.mxu0 0.0
        %1281 = vmatpush1.xpose.msra.mxu0 0.0
        %1282 = vmatprep.subr.mxu0 0.0
        %1283 = vmatpush1.xpose.msra.mxu0 0.0
        %1284 = vmatprep.subr.mxu0 0.0
        %1285 = vmatpush1.xpose.msra.mxu0 0.0
        %1286 = vmatprep.subr.mxu0 0.0
        %1287 = vmatpush1.xpose.msra.mxu0 0.0
        %1288 = vmatprep.subr.mxu0 0.0
        %1289 = vmatpush1.xpose.msra.mxu0 0.0
        %1290 = vmatprep.subr.mxu0 0.0
        %1291 = vmatpush1.xpose.msra.mxu0 0.0
        %1292 = vmatprep.subr.mxu0 0.0
        %1293 = vmatpush1.xpose.msra.mxu0 0.0
        %1294 = vmatprep.subr.mxu0 0.0
        %1295 = vmatpush1.xpose.msra.mxu0 0.0
        %1296 = vmatprep.subr.mxu0 0.0
        %1297 = vmatpush1.xpose.msra.mxu0 0.0
        %1298 = vmatprep.mubr.f32.mxu0 0.0
        %1299 = vmatmul.mubr.f32.gmra.mrb[0].mxu0 %v1226
        %v1300 = vpop.f32.mrb[0].mxu0
        %v1301 = vadd.f32 0.0, %v1300
        %v1302 = vpop.f32.mrb[0].mxu0
        %1303 = vmatprep.mubr.f32.mxu0 0.0
        %1304 = vmatmul.mubr.f32.gmra.mrb[0].mxu0 %v1228
        %v1305 = vpop.f32.mrb[0].mxu0
        %v1306 = vadd.f32 0.0, %v1305
        %v1307 = vpop.f32.mrb[0].mxu0
        %1308 = vdwg.mxu0
        %v1309 = vmul.f32 %v1301, 0.17677669
        %v1310 = vmul.f32 %v1306, 0.17677669
        %v1311 = vsel %vm708, %v1309, -inf
        %1312 = vmax.xlane.f32.xlu0 %v1311
        %v1313 = vpop.xlane.xlu0 %1312
        %v1314 = vsel %vm708, %v1310, -inf
        %1315 = vmax.xlane.f32.xlu0 %v1314
        %v1316 = vpop.xlane.xlu0 %1315
        %v1317 = vsub.f32 %v1309, %v1313
        %v1318 = vsub.f32 %v1310, %v1316
        %v1319 = vmul.f32 %v1317, 1.442695
        %v1320 = vpow.pop %v1319
        %v1321 = vmul.f32 %v1318, 1.442695
        %v1322 = vpow.pop %v1321
        %v1323 = vsel %vm708, %v1320, 0.0
        %1324 = vadd.xlane.f32.xlu0 %v1323
        %v1325 = vpop.xlane.xlu0 %1324
        %v1326 = vsel %vm708, %v1322, 0.0
        %1327 = vadd.xlane.f32.xlu0 %v1326
        %v1328 = vpop.xlane.xlu0 %1327
        %v1329 = vrcp.pop %v1325
        %v1330 = vmul.f32 %v1320, %v1329
        %v1331 = vrcp.pop %v1328
        %v1332 = vmul.f32 %v1322, %v1331
        %1333 = vrot.lane.b32.xlu0 %v610, 32
        %v1334 = vpop.permute.xlu0 %1333
        %1335 = vrot.lane.b32.xlu0 %v615, 32
        %v1336 = vpop.permute.xlu0 %1335
        %v1340 = vsel %vm708, %v1330, 0
        %v1343 = vsel %vm708, %v1332, 0
        %1345 = vmatprep.subr.mxu0 0.0
        %1346 = vmatpush1.msra.mxu0 %v1334
        %1347 = vmatprep.subr.mxu0 0.0
        %1348 = vmatpush1.msra.mxu0 %v1336
        %1349 = vmatprep.subr.mxu0 0.0
        %1350 = vmatpush1.msra.mxu0 0.0
        %1351 = vmatprep.subr.mxu0 0.0
        %1352 = vmatpush1.msra.mxu0 0.0
        %1353 = vmatprep.subr.mxu0 0.0
        %1354 = vmatpush1.msra.mxu0 0.0
        %1355 = vmatprep.subr.mxu0 0.0
        %1356 = vmatpush1.msra.mxu0 0.0
        %1357 = vmatprep.subr.mxu0 0.0
        %1358 = vmatpush1.msra.mxu0 0.0
        %1359 = vmatprep.subr.mxu0 0.0
        %1360 = vmatpush1.msra.mxu0 0.0
        %1361 = vmatprep.subr.mxu0 0.0
        %1362 = vmatpush1.msra.mxu0 0.0
        %1363 = vmatprep.subr.mxu0 0.0
        %1364 = vmatpush1.msra.mxu0 0.0
        %1365 = vmatprep.subr.mxu0 0.0
        %1366 = vmatpush1.msra.mxu0 0.0
        %1367 = vmatprep.subr.mxu0 0.0
        %1368 = vmatpush1.msra.mxu0 0.0
        %1369 = vmatprep.subr.mxu0 0.0
        %1370 = vmatpush1.msra.mxu0 0.0
        %1371 = vmatprep.subr.mxu0 0.0
        %1372 = vmatpush1.msra.mxu0 0.0
        %1373 = vmatprep.subr.mxu0 0.0
        %1374 = vmatpush1.msra.mxu0 0.0
        %1375 = vmatprep.subr.mxu0 0.0
        %1376 = vmatpush1.msra.mxu0 0.0
        %1377 = vmatprep.subr.mxu0 0.0
        %1378 = vmatpush1.msra.mxu0 0.0
        %1379 = vmatprep.subr.mxu0 0.0
        %1380 = vmatpush1.msra.mxu0 0.0
        %1381 = vmatprep.subr.mxu0 0.0
        %1382 = vmatpush1.msra.mxu0 0.0
        %1383 = vmatprep.subr.mxu0 0.0
        %1384 = vmatpush1.msra.mxu0 0.0
        %1385 = vmatprep.subr.mxu0 0.0
        %1386 = vmatpush1.msra.mxu0 0.0
        %1387 = vmatprep.subr.mxu0 0.0
        %1388 = vmatpush1.msra.mxu0 0.0
        %1389 = vmatprep.subr.mxu0 0.0
        %1390 = vmatpush1.msra.mxu0 0.0
        %1391 = vmatprep.subr.mxu0 0.0
        %1392 = vmatpush1.msra.mxu0 0.0
        %1393 = vmatprep.subr.mxu0 0.0
        %1394 = vmatpush1.msra.mxu0 0.0
        %1395 = vmatprep.subr.mxu0 0.0
        %1396 = vmatpush1.msra.mxu0 0.0
        %1397 = vmatprep.subr.mxu0 0.0
        %1398 = vmatpush1.msra.mxu0 0.0
        %1399 = vmatprep.subr.mxu0 0.0
        %1400 = vmatpush1.msra.mxu0 0.0
        %1401 = vmatprep.subr.mxu0 0.0
        %1402 = vmatpush1.msra.mxu0 0.0
        %1403 = vmatprep.subr.mxu0 0.0
        %1404 = vmatpush1.msra.mxu0 0.0
        %1405 = vmatprep.subr.mxu0 0.0
        %1406 = vmatpush1.msra.mxu0 0.0
        %1407 = vmatprep.subr.mxu0 0.0
        %1408 = vmatpush1.msra.mxu0 0.0
        %1409 = vmatprep.mubr.f32.mxu0 0.0
        %1410 = vmatmul.mubr.f32.gmra.mrb[0].mxu0 %v1340
        %v1411 = vpop.f32.mrb[0].mxu0
        %v1412 = vadd.f32 0.0, %v1411
        %v1413 = vpop.f32.mrb[0].mxu0
        %1414 = vmatprep.mubr.f32.mxu0 0.0
        %1415 = vmatmul.mubr.f32.gmra.mrb[0].mxu0 %v1343
        %v1416 = vpop.f32.mrb[0].mxu0
        %v1417 = vadd.f32 0.0, %v1416
        %v1418 = vpop.f32.mrb[0].mxu0
        %1419 = vdwg.mxu0
        %1422 = vrot.lane.b32.xlu0 %v1008, 32
        %v1423 = vpop.permute.xlu0 %1422
        %1424 = vrot.lane.b32.xlu0 %v1013, 32
        %v1425 = vpop.permute.xlu0 %1424
        %1430 = vrot.lane.b32.xlu0 %v1210, 64
        %v1431 = vpop.permute.xlu0 %1430
        %1432 = vrot.lane.b32.xlu0 %v1215, 64
        %v1433 = vpop.permute.xlu0 %1432
        %1438 = vrot.lane.b32.xlu0 %v1412, 96
        %v1439 = vpop.permute.xlu0 %1438
        %1440 = vrot.lane.b32.xlu0 %v1417, 96
        %v1441 = vpop.permute.xlu0 %1440
        %v1444 = vsel %vm618, %v804, %v1423
        %v1445 = vsel %vm618, %v809, %v1425
        %vm1446 = vcmask 523264
        %v1447 = vsel %vm1446, %v1444, %v1431
        %v1448 = vsel %vm1446, %v1445, %v1433
        %vm1449 = vcmask 785408
        %v1450 = vsel %vm1449, %v1447, %v1439
        %v1451 = vsel %vm1449, %v1448, %v1441
        %v1452 = vld [vmem:[%s5] sm:$0xff]
        %v1453 = vld [vmem:[%s5 + $0x8] sm:$0xff]
        %v1454 = vld [vmem:[%s5 + $0x10] sm:$0xff]
        %v1455 = vld [vmem:[%s5 + $0x18] sm:$0xff]
        %v1456 = vld [vmem:[%s5 + $0x20] sm:$0xff]
        %v1457 = vld [vmem:[%s5 + $0x28] sm:$0xff]
        %v1458 = vld [vmem:[%s5 + $0x30] sm:$0xff]
        %v1459 = vld [vmem:[%s5 + $0x38] sm:$0xff]
        %v1460 = vld [vmem:[%s5 + $0x40] sm:$0xff]
        %v1461 = vld [vmem:[%s5 + $0x48] sm:$0xff]
        %v1462 = vld [vmem:[%s5 + $0x50] sm:$0xff]
        %v1463 = vld [vmem:[%s5 + $0x58] sm:$0xff]
        %v1464 = vld [vmem:[%s5 + $0x60] sm:$0xff]
        %v1465 = vld [vmem:[%s5 + $0x68] sm:$0xff]
        %v1466 = vld [vmem:[%s5 + $0x70] sm:$0xff]
        %v1467 = vld [vmem:[%s5 + $0x78] sm:$0xff]
        %v1468 = vld [vmem:[%s6] sm:$0x1]
        %v1470 = vlaneseq
        %v1471 = vshrl.u32 %v1470, 7
        %v1472 = vsub.s32 0, %v1471
        %v1473 = vrot.slane %v1468, %v1472
        %1475 = vmatprep.subr.mxu0 0.0
        %1476 = vmatpush1.msra.mxu0 %v1452
        %1477 = vmatprep.subr.mxu0 0.0
        %1478 = vmatpush1.msra.mxu0 %v1453
        %1479 = vmatprep.subr.mxu0 0.0
        %1480 = vmatpush1.msra.mxu0 %v1454
        %1481 = vmatprep.subr.mxu0 0.0
        %1482 = vmatpush1.msra.mxu0 %v1455
        %1483 = vmatprep.subr.mxu0 0.0
        %1484 = vmatpush1.msra.mxu0 %v1456
        %1485 = vmatprep.subr.mxu0 0.0
        %1486 = vmatpush1.msra.mxu0 %v1457
        %1487 = vmatprep.subr.mxu0 0.0
        %1488 = vmatpush1.msra.mxu0 %v1458
        %1489 = vmatprep.subr.mxu0 0.0
        %1490 = vmatpush1.msra.mxu0 %v1459
        %1491 = vmatprep.subr.mxu0 0.0
        %1492 = vmatpush1.msra.mxu0 %v1460
        %1493 = vmatprep.subr.mxu0 0.0
        %1494 = vmatpush1.msra.mxu0 %v1461
        %1495 = vmatprep.subr.mxu0 0.0
        %1496 = vmatpush1.msra.mxu0 %v1462
        %1497 = vmatprep.subr.mxu0 0.0
        %1498 = vmatpush1.msra.mxu0 %v1463
        %1499 = vmatprep.subr.mxu0 0.0
        %1500 = vmatpush1.msra.mxu0 %v1464
        %1501 = vmatprep.subr.mxu0 0.0
        %1502 = vmatpush1.msra.mxu0 %v1465
        %1503 = vmatprep.subr.mxu0 0.0
        %1504 = vmatpush1.msra.mxu0 %v1466
        %1505 = vmatprep.subr.mxu0 0.0
        %1506 = vmatpush1.msra.mxu0 %v1467
        %1507 = vmatprep.subr.mxu0 0.0
        %1508 = vmatpush1.msra.mxu0 0.0
        %1509 = vmatprep.subr.mxu0 0.0
        %1510 = vmatpush1.msra.mxu0 0.0
        %1511 = vmatprep.subr.mxu0 0.0
        %1512 = vmatpush1.msra.mxu0 0.0
        %1513 = vmatprep.subr.mxu0 0.0
        %1514 = vmatpush1.msra.mxu0 0.0
        %1515 = vmatprep.subr.mxu0 0.0
        %1516 = vmatpush1.msra.mxu0 0.0
        %1517 = vmatprep.subr.mxu0 0.0
        %1518 = vmatpush1.msra.mxu0 0.0
        %1519 = vmatprep.subr.mxu0 0.0
        %1520 = vmatpush1.msra.mxu0 0.0
        %1521 = vmatprep.subr.mxu0 0.0
        %1522 = vmatpush1.msra.mxu0 0.0
        %1523 = vmatprep.subr.mxu0 0.0
        %1524 = vmatpush1.msra.mxu0 0.0
        %1525 = vmatprep.subr.mxu0 0.0
        %1526 = vmatpush1.msra.mxu0 0.0
        %1527 = vmatprep.subr.mxu0 0.0
        %1528 = vmatpush1.msra.mxu0 0.0
        %1529 = vmatprep.subr.mxu0 0.0
        %1530 = vmatpush1.msra.mxu0 0.0
        %1531 = vmatprep.subr.mxu0 0.0
        %1532 = vmatpush1.msra.mxu0 0.0
        %1533 = vmatprep.subr.mxu0 0.0
        %1534 = vmatpush1.msra.mxu0 0.0
        %1535 = vmatprep.subr.mxu0 0.0
        %1536 = vmatpush1.msra.mxu0 0.0
        %1537 = vmatprep.subr.mxu0 0.0
        %1538 = vmatpush1.msra.mxu0 0.0
        %1539 = vmatprep.mubr.f32.mxu0 0.0
        %1540 = vmatmul.mubr.f32.gmra.mrb[0].mxu0 %v1450
        %v1541 = vpop.f32.mrb[0].mxu0
        %v1542 = vadd.f32 %v1473, %v1541
        %v1543 = vpop.f32.mrb[0].mxu0
        %1544 = vmatprep.mubr.f32.mxu0 0.0
        %1545 = vmatmul.mubr.f32.gmra.mrb[0].mxu0 %v1451
        %v1546 = vpop.f32.mrb[0].mxu0
        %v1547 = vadd.f32 %v1473, %v1546
        %v1548 = vpop.f32.mrb[0].mxu0
        %1549 = vdwg.mxu0
        %1550 = vst [vmem:[%s271] sm:$0xff] %v1542
        %1551 = vst [vmem:[%s271 + $0x8] sm:$0xff] %v1547
        %s1552 = sand.u32 %s181, 1
        %s1553 = scalar_lea.sflag [#allocation3], %s1552
        %s1554 = sand.u32 %s181, 1
        %s1555 = smul.addr %s1554, 16
        %s1556 = scalar_lea.vmem [#allocation2], %s1555
        // Predicated region
        $region49: #{attention_forward.1} parent=47 // pred_check
          %p1557 = pneg %p191
        $region50: #{attention_forward.1} parent=47 // pred_check_branch
          %1559 = sbr.rel (%p1557) target = $region52
        $region51: #{attention_forward.1} parent=47 // pred_region
          %s1561 = ssub.s32 256, 256
          %1562 = vsyncadd %s1553, %s1561
          %s1563 = smul.addr %s21, 2
          %s1564 = smul.addr %s1563, 128
          %s1565 = scalar_lea.hbm %s7, %s1564
          %s1566 = sshll.u32 %s1556, 4
          %s1567 = int_to_ptr.vmem [resolvable:$true] %s1566
          %1572 = dma.vmem_to_hbm [thread:$0]  %s1567, 256, %s1565, %s1553, 128, 128, 8
        $region52: #{attention_forward.1} parent=47 // pred_fallthru
          _
      $region48: #{attention_forward.1} parent=5 // pred_fallthru
        _
      %p1573 = scmp.le.s32.totalorder 2, %s16
      // Predicated region
      $region53: #{attention_forward.1} parent=5 // pred_check
        %p1574 = pneg %p1573
      $region54: #{attention_forward.1} parent=5 // pred_check_branch
        %1576 = sbr.rel (%p1574) target = $region56
      $region55: #{attention_forward.1} parent=5 // pred_region
        %s1577 = ssub.s32 %s16, 2
        // Predicated region
        $region57: #{attention_forward.1} parent=55 // pred_check
          %p1578 = pneg %p197
        $region58: #{attention_forward.1} parent=55 // pred_check_branch
          %1580 = sbr.rel (%p1578) target = $region60
        $region59: #{attention_forward.1} parent=55 // pred_region
          %s1581 = sand.u32 %s182, 1
          %s1582 = scalar_lea.sflag [#allocation3], %s1581
          %s1583 = sand.u32 %s182, 1
          %s1584 = smul.addr %s1583, 16
          %s1585 = scalar_lea.vmem [#allocation2], %s1584
          %1586 = dma.done %s1582, 256
        $region60: #{attention_forward.1} parent=55 // pred_fallthru
          _
      $region56: #{attention_forward.1} parent=5 // pred_fallthru
        _
    $region6: #{attention_forward.1} parent=1 // loop_footer
      %s20 = sadd.s32 1, %s16
    $region7: #{attention_forward.1} parent=1 // loop_footer_branch
      %15 = sbr.rel target = $region3
    $region8: #{attention_forward.1} parent=1 // loop_exit
      _
    %1587 = vsyncpa [#allocation3], 1
    %s1588 = scalar_lea.sflag [#allocation3], 1
    %1589 = vsyncpa %s1588, 1

</llo_original>
